<compile_context>
chip_gen: v7x
topology: tpu7x:2x2x1
jax: 0.10.0
libtpu: 0.0.40
codegen_flags: <defaults>
</compile_context>

<pallas_src>
import numpy as np
import jax
import jax.numpy as jnp
from jax.experimental import pallas as pl
from jax.experimental.pallas import tpu as pltpu


# ----------------------------------------------------------------------------
# Pallas kernel: everything after the embedding gather, for one batch tile.
# ----------------------------------------------------------------------------
def pars_kernel(emb_ref, w_ih_ref, w_hh_ref, w_head_ref, bias_ref, sc_ref,
                out_ref):
    # emb_ref:    (p*d2, seq_len*B)  bf16  features on sublanes, (t, sample) on lanes
    # w_ih_ref:   (p*d2, p*d2)       bf16  kron(I_p, W_ih)
    # w_hh_ref:   (p*d2, p*d2)       bf16  kron(I_p, W_hh)
    # w_head_ref: (2p, p*d2)         bf16  [kron(I_p, W_att); kron(I_p, W_pred)]
    # bias_ref:   (p*d2, 1)          f32   tiled (b_ih + b_hh)
    # sc_ref:     (p*p + 2,) SMEM    f32   [W_path row-major, b_att, b_pred]
    # out_ref:    (1, B)             f32   lane-dense predictions
    pd2, seq_cols = emb_ref.shape
    n_b = out_ref.shape[-1]
    seq_len = seq_cols // n_b
    p2 = w_head_ref.shape[0]
    p = p2 // 2
    d2 = pd2 // p

    # Hoisted input projection for all timesteps + fused RNN bias (f32 acc).
    xw = (jnp.dot(w_ih_ref[...], emb_ref[...],
                  preferred_element_type=jnp.float32) + bias_ref[...])

    w_hh = w_hh_ref[...]

    def step(h_prev, x_t):
        z = jnp.dot(w_hh, h_prev.astype(jnp.bfloat16),
                    preferred_element_type=jnp.float32)
        return jnp.tanh(x_t + z)

    # Vanilla RNN recurrence (h0 = 0, so step 0 has no hidden-state term).
    h0 = jnp.tanh(xw[:, 0:n_b])
    if n_b % 256 == 0 and seq_len > 1:
        # Two independent lane-aligned column halves: the LLO scheduler can
        # run one half's W_hh matmul (MXU) under the other half's tanh (EUP).
        half = n_b // 2
        ha, hb = h0[:, :half], h0[:, half:]
        for t in range(1, seq_len):                  # static -> unrolled
            base = t * n_b
            ha = step(ha, xw[:, base:base + half])
            hb = step(hb, xw[:, base + half:base + n_b])
        h = jnp.concatenate([ha, hb], axis=1)
    else:
        h = h0
        for t in range(1, seq_len):                  # static -> unrolled
            h = step(h, xw[:, t * n_b:(t + 1) * n_b])

    # Path mixing sigmoid(W_path @ h) on the VPU: p*p scalar-broadcast FMAs
    # over (d2, B) sublane slices (kron(W_path, I_d2) on the MXU would be
    # ~97% structural zeros).
    hp_rows = []
    for q in range(p):
        acc = sc_ref[q * p] * h[0:d2, :]
        for r in range(1, p):
            acc = acc + sc_ref[q * p + r] * h[r * d2:(r + 1) * d2, :]
        hp_rows.append(jax.nn.sigmoid(acc))
    hp = jnp.concatenate(hp_rows, axis=0)                       # (p*d2, B) f32

    # Attention logits + per-path prediction scores in one (2p, p*d2) matmul.
    head = jnp.dot(w_head_ref[...], hp.astype(jnp.bfloat16),
                   preferred_element_type=jnp.float32)          # (2p, B)
    att = jax.nn.sigmoid(head[0:p, :] + sc_ref[p * p])          # (p, B)
    s = head[p:p2, :]                                           # (p, B)

    # Softmax over the p paths (sublane axis).
    att_max = jnp.max(att, axis=0, keepdims=True)
    e = jnp.exp(att - att_max)
    att = e * pl.reciprocal(jnp.sum(e, axis=0, keepdims=True), approx=True)

    # Weighted pooling + prediction bias; result is already lane-dense (1, B).
    logit = jnp.sum(att * s, axis=0, keepdims=True) + sc_ref[p * p + 1]
    out_ref[...] = jax.nn.sigmoid(logit)


# ----------------------------------------------------------------------------
# Host-side helpers (tiling choice + numpy relayout of gathered embeddings).
# ----------------------------------------------------------------------------
def _choose_tiles(batch, b_tile):
    b_tile = max(128, (b_tile // 128) * 128)
    # Shrink the tile (>=128 lanes) so the grid has at least 2 steps: v7x has
    # two TensorCores and the "parallel" axis only shards with >= 2 steps.
    max_tile = max(128, ((-(-batch // 2) + 127) // 128) * 128)
    b_tile = min(b_tile, max_tile)
    num_tiles = max(2, -(-batch // b_tile))
    return b_tile, num_tiles


def pack_embeddings(emb_seq, batch, p, b_tile, num_tiles):
    """Numpy relayout of (seq_len, batch*p, 2*dim) gathered embeddings into the
    kernel layout (num_tiles, p*2*dim, seq_len*b_tile) so the device transfer
    is already in kernel layout (no extra HBM transpose round trip)."""
    e = np.asarray(emb_seq, dtype=np.float32)
    seq_len, n, d2 = e.shape
    assert n == batch * p
    padded_batch = num_tiles * b_tile
    e = e.reshape(seq_len, batch, p, d2)
    if padded_batch != batch:
        e = np.pad(e, ((0, 0), (0, padded_batch - batch), (0, 0), (0, 0)))
    e = e.reshape(seq_len, num_tiles, b_tile, p, d2)
    e = e.transpose(1, 3, 4, 0, 2)                    # (tile, p, d2, t, b_local)
    return np.ascontiguousarray(e.reshape(num_tiles, p * d2, seq_len * b_tile))


def pars_pallas(emb_seq, params, *, batch, p, b_tile=512):
    """emb_seq: (seq_len, batch*p, 2*dim) gathered embeddings -> preds (batch,)"""
    seq_len, n, d2 = np.shape(emb_seq)
    assert n == batch * p
    pd2 = p * d2

    b_tile, num_tiles = _choose_tiles(batch, b_tile)
    padded_batch = num_tiles * b_tile
    assert b_tile % 128 == 0 and padded_batch >= b_tile

    # Activations packed host-side, transferred already in bf16 kernel layout.
    emb_t = jnp.asarray(pack_embeddings(emb_seq, batch, p, b_tile, num_tiles),
                        dtype=jnp.bfloat16)

    # Kronecker-expanded weights (built once; bf16 MXU operands).
    eye_p = jnp.eye(p, dtype=jnp.float32)
    w_ih_bd = jnp.kron(eye_p, params["w_ih"]).astype(jnp.bfloat16)   # (pd2, pd2)
    w_hh_bd = jnp.kron(eye_p, params["w_hh"]).astype(jnp.bfloat16)   # (pd2, pd2)
    w_head = jnp.concatenate(
        [jnp.kron(eye_p, params["w_att"]),                           # (p,  pd2)
         jnp.kron(eye_p, params["w_pred"])], axis=0                  # (p,  pd2)
    ).astype(jnp.bfloat16)                                           # (2p, pd2)
    bias_col = jnp.tile(params["b_ih"] + params["b_hh"], p) \
                  .reshape(pd2, 1).astype(jnp.float32)
    scalars = jnp.concatenate(
        [params["w_path"].reshape(-1),
         params["b_att"].reshape(-1),
         params["b_pred"].reshape(-1)]).astype(jnp.float32)          # (p*p+2,)

    # Explicit scoped-VMEM budget for the chosen tile (double-buffered I/O +
    # in-kernel f32 temporaries xw / h / hp).
    emb_block = pd2 * seq_len * b_tile * 2
    weight_bytes = (2 * pd2 * pd2 + 2 * p * pd2) * 2 + pd2 * 4
    tmp_bytes = pd2 * seq_len * b_tile * 4 + 8 * pd2 * b_tile * 4
    vmem_limit = int(min(max(32 << 20,
                             2 * (emb_block + weight_bytes + b_tile * 4)
                             + tmp_bytes + (4 << 20)),
                         64 << 20))

    rep2 = lambda i: (0, 0)
    mm_flops = int(2 * padded_batch * pd2 * (pd2 * (2 * seq_len - 1) + 2 * p)
                   + 2 * padded_batch * p * p * d2)
    transc = int(padded_batch * ((seq_len + 1) * pd2 + 3 * p + 1))
    bytes_acc = int(emb_t.size * 2 + (2 * pd2 * pd2 + 2 * p * pd2) * 2
                    + pd2 * 4 + (p * p + 2) * 4 + padded_batch * 4)

    # TODO(synk): on v7x, pipeline_mode=pl.Buffered(1) on the constant-index
    # weight specs would reclaim the second double-buffer copy once tiles grow.
    out = pl.pallas_call(
        pars_kernel,
        out_shape=jax.ShapeDtypeStruct((1, padded_batch), jnp.float32),
        grid_spec=pltpu.PrefetchScalarGridSpec(
            num_scalar_prefetch=0,
            grid=(num_tiles,),
            in_specs=[
                pl.BlockSpec((None, pd2, seq_len * b_tile),
                             lambda i: (i, 0, 0)),                # per-tile activations
                pl.BlockSpec((pd2, pd2), rep2),                   # kron(I_p, W_ih)
                pl.BlockSpec((pd2, pd2), rep2),                   # kron(I_p, W_hh)
                pl.BlockSpec((2 * p, pd2), rep2),                 # attention+predict head
                pl.BlockSpec((pd2, 1), rep2),                     # fused RNN bias
                pl.BlockSpec(memory_space=pltpu.MemorySpace.SMEM),  # W_path,b_att,b_pred
            ],
            out_specs=pl.BlockSpec((1, b_tile), lambda i: (0, i)),
        ),
        compiler_params=pltpu.CompilerParams(
            dimension_semantics=("parallel",),
            vmem_limit_bytes=vmem_limit),
        cost_estimate=pl.CostEstimate(flops=mm_flops, transcendentals=transc,
                                      bytes_accessed=bytes_acc),
    )(emb_t, w_ih_bd, w_hh_bd, w_head, bias_col, scalars)
    return out.reshape(padded_batch)[:batch]


# ----------------------------------------------------------------------------
# Glue: faithful re-implementation of PARS.get_embedding (gather only).
# ----------------------------------------------------------------------------
def get_embedding(paths_list, relation_dict, entity_emb, relation_emb,
                  p, dim, path_len):
    # TODO(synk): dict-driven gather has no Pallas equivalent; stays host-side.
    ent_np = np.asarray(entity_emb)
    rel_np = np.asarray(relation_emb)
    zeros = np.zeros((p, dim), np.float32)
    embeddings_list = []
    for i in range(path_len + 1):
        ent_rows, rel_rows = [], []
        for paths in paths_list:
            if len(paths) == 0:
                ent_rows.append(zeros)
                rel_rows.append(zeros)
                continue
            if i != path_len:
                rel_ids = [relation_dict[(path[i], path[i + 1])] for path in paths]
                rel_rows.append(rel_np[rel_ids])
            else:
                rel_rows.append(zeros)
            ent_rows.append(ent_np[[path[i] for path in paths]])
        ents = np.concatenate(ent_rows, axis=0)
        rels = np.concatenate(rel_rows, axis=0)
        embeddings_list.append(
            np.concatenate([ents, rels], axis=-1).reshape(1, -1, 2 * dim))
    return np.concatenate(embeddings_list, axis=0).astype(np.float32)


# ----------------------------------------------------------------------------
# Pure-JAX reference (mirrors the PyTorch forward) for a correctness check.
# ----------------------------------------------------------------------------
def pars_reference(emb_seq, params, batch, p):
    seq_len, n, d2 = emb_seq.shape
    h = jnp.zeros((n, d2), jnp.float32)
    for t in range(seq_len):
        h = jnp.tanh(emb_seq[t] @ params["w_ih"].T + params["b_ih"]
                     + h @ params["w_hh"].T + params["b_hh"])
    h = h.reshape(batch, p, d2)
    h = jax.nn.sigmoid(jnp.einsum("qp,bpd->bqd", params["w_path"], h))
    att = jax.nn.sigmoid(jnp.einsum("bpd,od->bpo", h, params["w_att"])
                         + params["b_att"])
    att = jax.nn.softmax(att, axis=1)
    final = (att * h).sum(axis=1)
    return jax.nn.sigmoid(final @ params["w_pred"].T + params["b_pred"]).reshape(-1)


if __name__ == "__main__":
    # Small, forward-consistent shapes.
    dim, p, path_len, batch = 16, 4, 3, 2
    n_entities, n_relations = 20, 6
    d2 = 2 * dim
    seq_len = path_len + 1

    key = jax.random.PRNGKey(0)
    ks = jax.random.split(key, 11)
    params = {
        "entity_emb":   jax.random.normal(ks[0], (n_entities, dim), jnp.float32),
        "relation_emb": jax.random.normal(ks[1], (n_relations, dim), jnp.float32),
        "w_ih":   0.1 * jax.random.normal(ks[2], (d2, d2), jnp.float32),
        "w_hh":   0.1 * jax.random.normal(ks[3], (d2, d2), jnp.float32),
        "b_ih":   0.1 * jax.random.normal(ks[4], (d2,), jnp.float32),
        "b_hh":   0.1 * jax.random.normal(ks[5], (d2,), jnp.float32),
        "w_path":       jax.random.normal(ks[6], (p, p), jnp.float32),
        "w_att":  0.1 * jax.random.normal(ks[7], (1, d2), jnp.float32),
        "b_att":  0.1 * jax.random.normal(ks[8], (1,), jnp.float32),
        "w_pred": 0.1 * jax.random.normal(ks[9], (1, d2), jnp.float32),
        "b_pred": 0.1 * jax.random.normal(ks[10], (1,), jnp.float32),
    }

    # Deterministic synthetic paths_list / relation_dict.
    rng = np.random.RandomState(0)
    paths_list, relation_dict = [], {}
    for _b in range(batch):
        paths = []
        for _j in range(p):
            path = [int(v) for v in rng.randint(0, n_entities, size=path_len + 1)]
            paths.append(path)
            for i in range(path_len):
                pair = (path[i], path[i + 1])
                if pair not in relation_dict:
                    relation_dict[pair] = int(rng.randint(0, n_relations))
        paths_list.append(paths)

    # Glue: embedding gather (equivalent of get_embedding + torch.cat).
    emb_np = get_embedding(paths_list, relation_dict,
                           params["entity_emb"], params["relation_emb"],
                           p, dim, path_len)           # (seq_len, batch*p, 2*dim)

    # Pallas kernel forward.
    preds = pars_pallas(emb_np, params, batch=batch, p=p)
    preds = jax.block_until_ready(preds)

    # Correctness check against the pure-JAX f32 reference of the PyTorch
    # forward.  Tolerance is pinned for bf16 MXU operands + approx-reciprocal
    # softmax normalization (both introduce ~1e-3-level relative shifts).
    ref = pars_reference(jnp.asarray(emb_np), params, batch, p)
    assert preds.shape == (batch,)
    assert np.allclose(np.asarray(preds), np.asarray(ref), atol=1e-2, rtol=1e-2), (
        preds, ref)

    print("KERNEL_OK")
</pallas_src>

<mosaic_0001>
module attributes {stable_mosaic.version = 11 : i64} {
  func.func @pars_kernel(%arg0: i32, %arg1: memref<1x128x512xbf16, #tpu.memory_space<vmem>>, %arg2: memref<128x128xbf16, #tpu.memory_space<vmem>>, %arg3: memref<128x128xbf16, #tpu.memory_space<vmem>>, %arg4: memref<8x128xbf16, #tpu.memory_space<vmem>>, %arg5: memref<128x1xf32, #tpu.memory_space<vmem>>, %arg6: memref<18xf32, #tpu.memory_space<smem>>, %arg7: memref<1x128xf32, #tpu.memory_space<vmem>>) attributes {dimension_semantics = [#tpu.dimension_semantics<parallel>], iteration_bounds = array<i64: 2>, scalar_prefetch = 0 : i64, scratch_operands = 0 : i64, tpu.core_type = #tpu.core_type<tc>, window_params = [{transform_indices = @transform_0, window_bounds = array<i64: 1, 128, 512>}, {pipeline_mode = #tpu.pipeline_mode<synchronous>, transform_indices = @transform_1, window_bounds = array<i64: 128, 128>}, {pipeline_mode = #tpu.pipeline_mode<synchronous>, transform_indices = @transform_2, window_bounds = array<i64: 128, 128>}, {pipeline_mode = #tpu.pipeline_mode<synchronous>, transform_indices = @transform_3, window_bounds = array<i64: 8, 128>}, {pipeline_mode = #tpu.pipeline_mode<synchronous>, transform_indices = @transform_4, window_bounds = array<i64: 128, 1>}, {transform_indices = @transform_5, window_bounds = array<i64: 18>}, {transform_indices = @transform_6, window_bounds = array<i64: 1, 128>}]} {
    %c0 = arith.constant 0 : index
    %c0_0 = arith.constant 0 : index
    %0 = vector.load %arg2[%c0, %c0_0] : memref<128x128xbf16, #tpu.memory_space<vmem>>, vector<128x128xbf16>
    %c0_1 = arith.constant 0 : index
    %c0_2 = arith.constant 0 : index
    %c0_3 = arith.constant 0 : index
    %1 = vector.load %arg1[%c0_1, %c0_2, %c0_3] : memref<1x128x512xbf16, #tpu.memory_space<vmem>>, vector<1x128x512xbf16>
    %2 = vector.shape_cast %1 : vector<1x128x512xbf16> to vector<128x512xbf16>
    %cst = arith.constant dense<0.000000e+00> : vector<128x512xf32>
    %3 = tpu.matmul %0, %2, %cst {dimension_numbers = #tpu.dot_dimension_numbers<[1], [0], [0], [1], [0, 0, 1, 1], [], []>} : vector<128x128xbf16>, vector<128x512xbf16>, vector<128x512xf32> -> vector<128x512xf32>
    %c0_4 = arith.constant 0 : index
    %c0_5 = arith.constant 0 : index
    %4 = vector.load %arg5[%c0_4, %c0_5] : memref<128x1xf32, #tpu.memory_space<vmem>>, vector<128x1xf32>
    %5 = vector.broadcast %4 : vector<128x1xf32> to vector<128x512xf32>
    %6 = arith.addf %3, %5 : vector<128x512xf32>
    %c0_6 = arith.constant 0 : index
    %c0_7 = arith.constant 0 : index
    %7 = vector.load %arg3[%c0_6, %c0_7] : memref<128x128xbf16, #tpu.memory_space<vmem>>, vector<128x128xbf16>
    %8 = vector.extract_strided_slice %6 {offsets = [0, 0], sizes = [128, 128], strides = [1, 1]} : vector<128x512xf32> to vector<128x128xf32>
    %9 = math.tanh %8 : vector<128x128xf32>
    %10 = vector.extract_strided_slice %6 {offsets = [0, 128], sizes = [128, 128], strides = [1, 1]} : vector<128x512xf32> to vector<128x128xf32>
    %11 = arith.truncf %9 : vector<128x128xf32> to vector<128x128xbf16>
    %cst_8 = arith.constant dense<0.000000e+00> : vector<128x128xf32>
    %12 = tpu.matmul %7, %11, %cst_8 {dimension_numbers = #tpu.dot_dimension_numbers<[1], [0], [0], [1], [0, 0, 1, 1], [], []>} : vector<128x128xbf16>, vector<128x128xbf16>, vector<128x128xf32> -> vector<128x128xf32>
    %13 = arith.addf %10, %12 : vector<128x128xf32>
    %14 = math.tanh %13 : vector<128x128xf32>
    %15 = vector.extract_strided_slice %6 {offsets = [0, 256], sizes = [128, 128], strides = [1, 1]} : vector<128x512xf32> to vector<128x128xf32>
    %16 = arith.truncf %14 : vector<128x128xf32> to vector<128x128xbf16>
    %cst_9 = arith.constant dense<0.000000e+00> : vector<128x128xf32>
    %17 = tpu.matmul %7, %16, %cst_9 {dimension_numbers = #tpu.dot_dimension_numbers<[1], [0], [0], [1], [0, 0, 1, 1], [], []>} : vector<128x128xbf16>, vector<128x128xbf16>, vector<128x128xf32> -> vector<128x128xf32>
    %18 = arith.addf %15, %17 : vector<128x128xf32>
    %19 = math.tanh %18 : vector<128x128xf32>
    %20 = vector.extract_strided_slice %6 {offsets = [0, 384], sizes = [128, 128], strides = [1, 1]} : vector<128x512xf32> to vector<128x128xf32>
    %21 = arith.truncf %19 : vector<128x128xf32> to vector<128x128xbf16>
    %cst_10 = arith.constant dense<0.000000e+00> : vector<128x128xf32>
    %22 = tpu.matmul %7, %21, %cst_10 {dimension_numbers = #tpu.dot_dimension_numbers<[1], [0], [0], [1], [0, 0, 1, 1], [], []>} : vector<128x128xbf16>, vector<128x128xbf16>, vector<128x128xf32> -> vector<128x128xf32>
    %23 = arith.addf %20, %22 : vector<128x128xf32>
    %24 = math.tanh %23 : vector<128x128xf32>
    %c0_11 = arith.constant 0 : index
    %25 = memref.load %arg6[%c0_11] : memref<18xf32, #tpu.memory_space<smem>>
    %26 = vector.extract_strided_slice %24 {offsets = [0, 0], sizes = [32, 128], strides = [1, 1]} : vector<128x128xf32> to vector<32x128xf32>
    %27 = vector.broadcast %25 : f32 to vector<32x128xf32>
    %28 = arith.mulf %27, %26 : vector<32x128xf32>
    %c1 = arith.constant 1 : index
    %29 = memref.load %arg6[%c1] : memref<18xf32, #tpu.memory_space<smem>>
    %30 = vector.extract_strided_slice %24 {offsets = [32, 0], sizes = [32, 128], strides = [1, 1]} : vector<128x128xf32> to vector<32x128xf32>
    %31 = vector.broadcast %29 : f32 to vector<32x128xf32>
    %32 = arith.mulf %31, %30 : vector<32x128xf32>
    %33 = arith.addf %28, %32 : vector<32x128xf32>
    %c2 = arith.constant 2 : index
    %34 = memref.load %arg6[%c2] : memref<18xf32, #tpu.memory_space<smem>>
    %35 = vector.extract_strided_slice %24 {offsets = [64, 0], sizes = [32, 128], strides = [1, 1]} : vector<128x128xf32> to vector<32x128xf32>
    %36 = vector.broadcast %34 : f32 to vector<32x128xf32>
    %37 = arith.mulf %36, %35 : vector<32x128xf32>
    %38 = arith.addf %33, %37 : vector<32x128xf32>
    %c3 = arith.constant 3 : index
    %39 = memref.load %arg6[%c3] : memref<18xf32, #tpu.memory_space<smem>>
    %40 = vector.extract_strided_slice %24 {offsets = [96, 0], sizes = [32, 128], strides = [1, 1]} : vector<128x128xf32> to vector<32x128xf32>
    %41 = vector.broadcast %39 : f32 to vector<32x128xf32>
    %42 = arith.mulf %41, %40 : vector<32x128xf32>
    %43 = arith.addf %38, %42 : vector<32x128xf32>
    %44 = arith.negf %43 : vector<32x128xf32>
    %45 = math.exp %44 : vector<32x128xf32>
    %cst_12 = arith.constant 1.000000e+00 : f32
    %46 = vector.broadcast %cst_12 : f32 to vector<32x128xf32>
    %47 = arith.addf %46, %45 : vector<32x128xf32>
    %48 = arith.divf %46, %47 : vector<32x128xf32>
    %c4 = arith.constant 4 : index
    %49 = memref.load %arg6[%c4] : memref<18xf32, #tpu.memory_space<smem>>
    %50 = vector.extract_strided_slice %24 {offsets = [0, 0], sizes = [32, 128], strides = [1, 1]} : vector<128x128xf32> to vector<32x128xf32>
    %51 = vector.broadcast %49 : f32 to vector<32x128xf32>
    %52 = arith.mulf %51, %50 : vector<32x128xf32>
    %c5 = arith.constant 5 : index
    %53 = memref.load %arg6[%c5] : memref<18xf32, #tpu.memory_space<smem>>
    %54 = vector.extract_strided_slice %24 {offsets = [32, 0], sizes = [32, 128], strides = [1, 1]} : vector<128x128xf32> to vector<32x128xf32>
    %55 = vector.broadcast %53 : f32 to vector<32x128xf32>
    %56 = arith.mulf %55, %54 : vector<32x128xf32>
    %57 = arith.addf %52, %56 : vector<32x128xf32>
    %c6 = arith.constant 6 : index
    %58 = memref.load %arg6[%c6] : memref<18xf32, #tpu.memory_space<smem>>
    %59 = vector.extract_strided_slice %24 {offsets = [64, 0], sizes = [32, 128], strides = [1, 1]} : vector<128x128xf32> to vector<32x128xf32>
    %60 = vector.broadcast %58 : f32 to vector<32x128xf32>
    %61 = arith.mulf %60, %59 : vector<32x128xf32>
    %62 = arith.addf %57, %61 : vector<32x128xf32>
    %c7 = arith.constant 7 : index
    %63 = memref.load %arg6[%c7] : memref<18xf32, #tpu.memory_space<smem>>
    %64 = vector.extract_strided_slice %24 {offsets = [96, 0], sizes = [32, 128], strides = [1, 1]} : vector<128x128xf32> to vector<32x128xf32>
    %65 = vector.broadcast %63 : f32 to vector<32x128xf32>
    %66 = arith.mulf %65, %64 : vector<32x128xf32>
    %67 = arith.addf %62, %66 : vector<32x128xf32>
    %68 = arith.negf %67 : vector<32x128xf32>
    %69 = math.exp %68 : vector<32x128xf32>
    %cst_13 = arith.constant 1.000000e+00 : f32
    %70 = vector.broadcast %cst_13 : f32 to vector<32x128xf32>
    %71 = arith.addf %70, %69 : vector<32x128xf32>
    %72 = arith.divf %70, %71 : vector<32x128xf32>
    %c8 = arith.constant 8 : index
    %73 = memref.load %arg6[%c8] : memref<18xf32, #tpu.memory_space<smem>>
    %74 = vector.extract_strided_slice %24 {offsets = [0, 0], sizes = [32, 128], strides = [1, 1]} : vector<128x128xf32> to vector<32x128xf32>
    %75 = vector.broadcast %73 : f32 to vector<32x128xf32>
    %76 = arith.mulf %75, %74 : vector<32x128xf32>
    %c9 = arith.constant 9 : index
    %77 = memref.load %arg6[%c9] : memref<18xf32, #tpu.memory_space<smem>>
    %78 = vector.extract_strided_slice %24 {offsets = [32, 0], sizes = [32, 128], strides = [1, 1]} : vector<128x128xf32> to vector<32x128xf32>
    %79 = vector.broadcast %77 : f32 to vector<32x128xf32>
    %80 = arith.mulf %79, %78 : vector<32x128xf32>
    %81 = arith.addf %76, %80 : vector<32x128xf32>
    %c10 = arith.constant 10 : index
    %82 = memref.load %arg6[%c10] : memref<18xf32, #tpu.memory_space<smem>>
    %83 = vector.extract_strided_slice %24 {offsets = [64, 0], sizes = [32, 128], strides = [1, 1]} : vector<128x128xf32> to vector<32x128xf32>
    %84 = vector.broadcast %82 : f32 to vector<32x128xf32>
    %85 = arith.mulf %84, %83 : vector<32x128xf32>
    %86 = arith.addf %81, %85 : vector<32x128xf32>
    %c11 = arith.constant 11 : index
    %87 = memref.load %arg6[%c11] : memref<18xf32, #tpu.memory_space<smem>>
    %88 = vector.extract_strided_slice %24 {offsets = [96, 0], sizes = [32, 128], strides = [1, 1]} : vector<128x128xf32> to vector<32x128xf32>
    %89 = vector.broadcast %87 : f32 to vector<32x128xf32>
    %90 = arith.mulf %89, %88 : vector<32x128xf32>
    %91 = arith.addf %86, %90 : vector<32x128xf32>
    %92 = arith.negf %91 : vector<32x128xf32>
    %93 = math.exp %92 : vector<32x128xf32>
    %cst_14 = arith.constant 1.000000e+00 : f32
    %94 = vector.broadcast %cst_14 : f32 to vector<32x128xf32>
    %95 = arith.addf %94, %93 : vector<32x128xf32>
    %96 = arith.divf %94, %95 : vector<32x128xf32>
    %c12 = arith.constant 12 : index
    %97 = memref.load %arg6[%c12] : memref<18xf32, #tpu.memory_space<smem>>
    %98 = vector.extract_strided_slice %24 {offsets = [0, 0], sizes = [32, 128], strides = [1, 1]} : vector<128x128xf32> to vector<32x128xf32>
    %99 = vector.broadcast %97 : f32 to vector<32x128xf32>
    %100 = arith.mulf %99, %98 : vector<32x128xf32>
    %c13 = arith.constant 13 : index
    %101 = memref.load %arg6[%c13] : memref<18xf32, #tpu.memory_space<smem>>
    %102 = vector.extract_strided_slice %24 {offsets = [32, 0], sizes = [32, 128], strides = [1, 1]} : vector<128x128xf32> to vector<32x128xf32>
    %103 = vector.broadcast %101 : f32 to vector<32x128xf32>
    %104 = arith.mulf %103, %102 : vector<32x128xf32>
    %105 = arith.addf %100, %104 : vector<32x128xf32>
    %c14 = arith.constant 14 : index
    %106 = memref.load %arg6[%c14] : memref<18xf32, #tpu.memory_space<smem>>
    %107 = vector.extract_strided_slice %24 {offsets = [64, 0], sizes = [32, 128], strides = [1, 1]} : vector<128x128xf32> to vector<32x128xf32>
    %108 = vector.broadcast %106 : f32 to vector<32x128xf32>
    %109 = arith.mulf %108, %107 : vector<32x128xf32>
    %110 = arith.addf %105, %109 : vector<32x128xf32>
    %c15 = arith.constant 15 : index
    %111 = memref.load %arg6[%c15] : memref<18xf32, #tpu.memory_space<smem>>
    %112 = vector.extract_strided_slice %24 {offsets = [96, 0], sizes = [32, 128], strides = [1, 1]} : vector<128x128xf32> to vector<32x128xf32>
    %113 = vector.broadcast %111 : f32 to vector<32x128xf32>
    %114 = arith.mulf %113, %112 : vector<32x128xf32>
    %115 = arith.addf %110, %114 : vector<32x128xf32>
    %116 = arith.negf %115 : vector<32x128xf32>
    %117 = math.exp %116 : vector<32x128xf32>
    %cst_15 = arith.constant 1.000000e+00 : f32
    %118 = vector.broadcast %cst_15 : f32 to vector<32x128xf32>
    %119 = arith.addf %118, %117 : vector<32x128xf32>
    %120 = arith.divf %118, %119 : vector<32x128xf32>
    %121 = tpu.concatenate %48, %72, %96, %120 in 0 : vector<32x128xf32>, vector<32x128xf32>, vector<32x128xf32>, vector<32x128xf32> -> vector<128x128xf32>
    %c0_16 = arith.constant 0 : index
    %c0_17 = arith.constant 0 : index
    %122 = vector.load %arg4[%c0_16, %c0_17] : memref<8x128xbf16, #tpu.memory_space<vmem>>, vector<8x128xbf16>
    %123 = arith.truncf %121 : vector<128x128xf32> to vector<128x128xbf16>
    %cst_18 = arith.constant dense<0.000000e+00> : vector<8x128xf32>
    %124 = tpu.matmul %122, %123, %cst_18 {dimension_numbers = #tpu.dot_dimension_numbers<[1], [0], [0], [1], [0, 0, 1, 1], [], []>} : vector<8x128xbf16>, vector<128x128xbf16>, vector<8x128xf32> -> vector<8x128xf32>
    %125 = vector.extract_strided_slice %124 {offsets = [0, 0], sizes = [4, 128], strides = [1, 1]} : vector<8x128xf32> to vector<4x128xf32>
    %c16 = arith.constant 16 : index
    %126 = memref.load %arg6[%c16] : memref<18xf32, #tpu.memory_space<smem>>
    %127 = vector.broadcast %126 : f32 to vector<4x128xf32>
    %128 = arith.addf %125, %127 : vector<4x128xf32>
    %129 = arith.negf %128 : vector<4x128xf32>
    %130 = math.exp %129 : vector<4x128xf32>
    %cst_19 = arith.constant 1.000000e+00 : f32
    %131 = vector.broadcast %cst_19 : f32 to vector<4x128xf32>
    %132 = arith.addf %131, %130 : vector<4x128xf32>
    %133 = arith.divf %131, %132 : vector<4x128xf32>
    %134 = vector.extract_strided_slice %124 {offsets = [4, 0], sizes = [4, 128], strides = [1, 1]} : vector<8x128xf32> to vector<4x128xf32>
    %cst_20 = arith.constant dense<0xFF800000> : vector<128xf32>
    %135 = vector.multi_reduction <maximumf>, %133, %cst_20 [0] : vector<4x128xf32> to vector<128xf32>
    %136 = vector.shape_cast %135 : vector<128xf32> to vector<1x128xf32>
    %137 = vector.broadcast %136 : vector<1x128xf32> to vector<4x128xf32>
    %138 = arith.subf %133, %137 : vector<4x128xf32>
    %139 = math.exp %138 : vector<4x128xf32>
    %cst_21 = arith.constant dense<0.000000e+00> : vector<128xf32>
    %140 = vector.multi_reduction <add>, %139, %cst_21 [0] : vector<4x128xf32> to vector<128xf32>
    %141 = vector.shape_cast %140 : vector<128xf32> to vector<1x128xf32>
    %142 = tpu.reciprocal %141 {approx = true} : vector<1x128xf32> -> vector<1x128xf32>
    %143 = vector.broadcast %142 : vector<1x128xf32> to vector<4x128xf32>
    %144 = arith.mulf %139, %143 : vector<4x128xf32>
    %145 = arith.mulf %144, %134 : vector<4x128xf32>
    %cst_22 = arith.constant dense<0.000000e+00> : vector<128xf32>
    %146 = vector.multi_reduction <add>, %145, %cst_22 [0] : vector<4x128xf32> to vector<128xf32>
    %147 = vector.shape_cast %146 : vector<128xf32> to vector<1x128xf32>
    %c17 = arith.constant 17 : index
    %148 = memref.load %arg6[%c17] : memref<18xf32, #tpu.memory_space<smem>>
    %149 = vector.broadcast %148 : f32 to vector<1x128xf32>
    %150 = arith.addf %147, %149 : vector<1x128xf32>
    %151 = arith.negf %150 : vector<1x128xf32>
    %152 = math.exp %151 : vector<1x128xf32>
    %cst_23 = arith.constant 1.000000e+00 : f32
    %153 = vector.broadcast %cst_23 : f32 to vector<1x128xf32>
    %154 = arith.addf %153, %152 : vector<1x128xf32>
    %155 = arith.divf %153, %154 : vector<1x128xf32>
    %c0_24 = arith.constant 0 : index
    %c0_25 = arith.constant 0 : index
    %156 = vector.load %arg7[%c0_24, %c0_25] : memref<1x128xf32, #tpu.memory_space<vmem>>, vector<1x128xf32>
    tpu.vector_store %arg7[%c0_24, %c0_25], %155 {strides = array<i32>} : memref<1x128xf32, #tpu.memory_space<vmem>>, vector<1x128xf32>,
    return
  }
  func.func @transform_0(%arg0: i32) -> (i32, i32, i32) {
    %c0_i32 = arith.constant 0 : i32
    %c0_i32_0 = arith.constant 0 : i32
    %c0_i32_1 = arith.constant 0 : i32
    return %arg0, %c0_i32, %c0_i32_0 : i32, i32, i32
  }
  func.func @transform_1(%arg0: i32) -> (i32, i32) {
    %c0_i32 = arith.constant 0 : i32
    %c0_i32_0 = arith.constant 0 : i32
    %c0_i32_1 = arith.constant 0 : i32
    return %c0_i32, %c0_i32_0 : i32, i32
  }
  func.func @transform_2(%arg0: i32) -> (i32, i32) {
    %c0_i32 = arith.constant 0 : i32
    %c0_i32_0 = arith.constant 0 : i32
    %c0_i32_1 = arith.constant 0 : i32
    return %c0_i32, %c0_i32_0 : i32, i32
  }
  func.func @transform_3(%arg0: i32) -> (i32, i32) {
    %c0_i32 = arith.constant 0 : i32
    %c0_i32_0 = arith.constant 0 : i32
    %c0_i32_1 = arith.constant 0 : i32
    return %c0_i32, %c0_i32_0 : i32, i32
  }
  func.func @transform_4(%arg0: i32) -> (i32, i32) {
    %c0_i32 = arith.constant 0 : i32
    %c0_i32_0 = arith.constant 0 : i32
    %c0_i32_1 = arith.constant 0 : i32
    return %c0_i32, %c0_i32_0 : i32, i32
  }
  func.func @transform_5(%arg0: i32) -> i32 {
    %c0_i32 = arith.constant 0 : i32
    %c0_i32_0 = arith.constant 0 : i32
    return %c0_i32 : i32
  }
  func.func @transform_6(%arg0: i32) -> (i32, i32) {
    %c0_i32 = arith.constant 0 : i32
    %c0_i32_0 = arith.constant 0 : i32
    return %c0_i32, %arg0 : i32, i32
  }
}

</mosaic_0001>

<llo_original>
// kernel: tpu_custom_call.1
$region0: #{tpu_custom_call.1}
  #allocation0 [shape = 'u32[]', space=smem, size = 0x4, offset = 0x4, fixed_abs, tag = 'smem constant byte address 0x4 - core index']
  #allocation1 [shape = 'u32[144,128]{1,0:T(1,128)}', space=vmem, size = 0x12000, scoped, tag = 'internal scratch']
  %s0 = inlined_call_operand.hbm [shape: bf16[2,128,512], index: 0, kind: input, shape index: {}]
  %s1 = inlined_call_operand.vmem [shape: bf16[128,128], index: 1, kind: input, shape index: {}]
  %s2 = inlined_call_operand.vmem [shape: bf16[128,128], index: 2, kind: input, shape index: {}]
  %s3 = inlined_call_operand.vmem [shape: bf16[8,128], index: 3, kind: input, shape index: {}]
  %s4 = inlined_call_operand.vmem [shape: f32[128,1], index: 4, kind: input, shape index: {}]
  %s5 = inlined_call_operand.vmem [shape: f32[18], index: 5, kind: input, shape index: {}]
  %s6 = inlined_call_operand.hbm [shape: f32[1,256], index: 6, kind: output, shape index: {}]
  %s7 = sld [smem:[#allocation0]]
  $region65: #{tpu_custom_call.1} parent=0
    _
  %s9 = ssub.s32 1, %s7
  %s10 = scalar_select 0, %s9, %s7
  $region1: #{tpu_custom_call.1} parent=0
    #allocation2 [shape = 'u8[262144]{0}', space=vmem, size = 0x40000, scoped, tag = 'input window, operand 0']
    #allocation3 [shape = 's32[2]{0}', space=sflag, size = 0x8, scoped, tag = 'scoped memory for tpu_custom_call.1']
    #allocation4 [shape = 's32[2]{0}', space=sflag, size = 0x8, scoped, tag = 'scoped memory for tpu_custom_call.1']
    #allocation5 [shape = 's32[2]{0}', space=sflag, size = 0x8, scoped, tag = 'scoped memory for tpu_custom_call.1']
    #allocation6 [shape = 'u8[512]{0}', space=smem, size = 0x200, scoped, tag = 'input window, operand 5, single buffered']
    #allocation7 [shape = 'u8[1024]{0}', space=vmem, size = 0x400, scoped, tag = 'output window, operand 0']
    %11 = vsyncpa [#allocation3], 0
    %s12 = scalar_lea.sflag [#allocation3], 1
    %13 = vsyncpa %s12, 0
    %14 = vsyncpa [#allocation5], 0
    %15 = vsyncpa [#allocation4], 0
    %s16 = scalar_lea.sflag [#allocation4], 1
    %17 = vsyncpa %s16, 0
    loop: start=0, step=1, limit=4
    $region2: #{tpu_custom_call.1} parent=1 // loop_pre_header
      _
    $region3: #{tpu_custom_call.1} parent=1 // loop_header
      %s19 = sphi 0, %s23
      %p20 = scmp.ge.s32.totalorder %s19, 4
      %s29 = sphi 0, %s31
      %s32 = sphi 0, %s29
      %s33 = sphi 0, %s32
      %s49 = sphi 0, %s33
      %s53 = sphi 0, %s53
      %s55 = sphi 0, %s53
      %s56 = sphi 0, %s55
      %s70 = sphi 0, %s56
      %s74 = sphi 0, %s74
      %s76 = sphi 0, %s74
      %s77 = sphi 0, %s76
      %s91 = sphi 0, %s77
      %s95 = sphi 0, %s95
      %s97 = sphi 0, %s95
      %s98 = sphi 0, %s97
      %s112 = sphi 0, %s98
      %s116 = sphi 0, %s116
      %s118 = sphi 0, %s116
      %s119 = sphi 0, %s118
      %s133 = sphi 0, %s119
      %s137 = sphi 0, %s137
      %s139 = sphi 0, %s137
      %s140 = sphi 0, %s139
      %s154 = sphi 0, %s140
      %s160 = sphi 0, %s162
      %s163 = sphi 0, %s160
      %s164 = sphi 0, %s163
      %s180 = sphi 0, %s164
    $region4: #{tpu_custom_call.1} parent=1 // loop_header_branch
      %22 = sbr.rel (%p20) target = $region8
    $region5: #{tpu_custom_call.1} parent=1 // loop_body
      %s24 = ssub.s32 %s19, 1
      %s25 = ssub.s32 %s19, 2
      %s26 = sadd.s32 %s19, 1
      %s27 = ssub.s32 %s19, %s26
      %p28 = scmp.eq.s32.totalorder %s27, 0
      %s30 = sadd.s32 %s29, 1
      %s31 = scalar_select %p28, %s29, %s30
      %p34 = pneg %p28
      %p35 = scmp.eq.s32.totalorder %s19, 1
      %p36 = por %p34, %p35
      %p37 = scmp.ne.s32.totalorder %s29, %s32
      %p38 = scmp.eq.s32.totalorder %s19, 0
      %p39 = por %p37, %p38
      %p40 = scmp.ne.s32.totalorder %s29, %s32
      %p41 = scmp.eq.s32.totalorder %s24, 1
      %p42 = por %p40, %p41
      %p43 = scmp.ne.s32.totalorder %s32, %s33
      %p44 = scmp.eq.s32.totalorder %s24, 0
      %p45 = por %p43, %p44
      %p46 = scmp.ne.s32.totalorder %s32, %s33
      %p47 = scmp.eq.s32.totalorder %s25, 1
      %p48 = por %p46, %p47
      %p50 = scmp.ne.s32.totalorder %s33, %s49
      %p51 = scmp.eq.s32.totalorder %s25, 0
      %p52 = por %p50, %p51
      %s54 = sadd.s32 %s53, 1
      %p57 = scmp.eq.s32.totalorder %s19, 1
      %p58 = scmp.ne.s32.totalorder %s53, %s55
      %p59 = scmp.eq.s32.totalorder %s19, 0
      %p60 = por %p58, %p59
      %p61 = scmp.ne.s32.totalorder %s53, %s55
      %p62 = scmp.eq.s32.totalorder %s24, 1
      %p63 = por %p61, %p62
      %p64 = scmp.ne.s32.totalorder %s55, %s56
      %p65 = scmp.eq.s32.totalorder %s24, 0
      %p66 = por %p64, %p65
      %p67 = scmp.ne.s32.totalorder %s55, %s56
      %p68 = scmp.eq.s32.totalorder %s25, 1
      %p69 = por %p67, %p68
      %p71 = scmp.ne.s32.totalorder %s56, %s70
      %p72 = scmp.eq.s32.totalorder %s25, 0
      %p73 = por %p71, %p72
      %s75 = sadd.s32 %s74, 1
      %p78 = scmp.eq.s32.totalorder %s19, 1
      %p79 = scmp.ne.s32.totalorder %s74, %s76
      %p80 = scmp.eq.s32.totalorder %s19, 0
      %p81 = por %p79, %p80
      %p82 = scmp.ne.s32.totalorder %s74, %s76
      %p83 = scmp.eq.s32.totalorder %s24, 1
      %p84 = por %p82, %p83
      %p85 = scmp.ne.s32.totalorder %s76, %s77
      %p86 = scmp.eq.s32.totalorder %s24, 0
      %p87 = por %p85, %p86
      %p88 = scmp.ne.s32.totalorder %s76, %s77
      %p89 = scmp.eq.s32.totalorder %s25, 1
      %p90 = por %p88, %p89
      %p92 = scmp.ne.s32.totalorder %s77, %s91
      %p93 = scmp.eq.s32.totalorder %s25, 0
      %p94 = por %p92, %p93
      %s96 = sadd.s32 %s95, 1
      %p99 = scmp.eq.s32.totalorder %s19, 1
      %p100 = scmp.ne.s32.totalorder %s95, %s97
      %p101 = scmp.eq.s32.totalorder %s19, 0
      %p102 = por %p100, %p101
      %p103 = scmp.ne.s32.totalorder %s95, %s97
      %p104 = scmp.eq.s32.totalorder %s24, 1
      %p105 = por %p103, %p104
      %p106 = scmp.ne.s32.totalorder %s97, %s98
      %p107 = scmp.eq.s32.totalorder %s24, 0
      %p108 = por %p106, %p107
      %p109 = scmp.ne.s32.totalorder %s97, %s98
      %p110 = scmp.eq.s32.totalorder %s25, 1
      %p111 = por %p109, %p110
      %p113 = scmp.ne.s32.totalorder %s98, %s112
      %p114 = scmp.eq.s32.totalorder %s25, 0
      %p115 = por %p113, %p114
      %s117 = sadd.s32 %s116, 1
      %p120 = scmp.eq.s32.totalorder %s19, 1
      %p121 = scmp.ne.s32.totalorder %s116, %s118
      %p122 = scmp.eq.s32.totalorder %s19, 0
      %p123 = por %p121, %p122
      %p124 = scmp.ne.s32.totalorder %s116, %s118
      %p125 = scmp.eq.s32.totalorder %s24, 1
      %p126 = por %p124, %p125
      %p127 = scmp.ne.s32.totalorder %s118, %s119
      %p128 = scmp.eq.s32.totalorder %s24, 0
      %p129 = por %p127, %p128
      %p130 = scmp.ne.s32.totalorder %s118, %s119
      %p131 = scmp.eq.s32.totalorder %s25, 1
      %p132 = por %p130, %p131
      %p134 = scmp.ne.s32.totalorder %s119, %s133
      %p135 = scmp.eq.s32.totalorder %s25, 0
      %p136 = por %p134, %p135
      %s138 = sadd.s32 %s137, 1
      %p141 = scmp.eq.s32.totalorder %s19, 1
      %p142 = scmp.ne.s32.totalorder %s137, %s139
      %p143 = scmp.eq.s32.totalorder %s19, 0
      %p144 = por %p142, %p143
      %p145 = scmp.ne.s32.totalorder %s137, %s139
      %p146 = scmp.eq.s32.totalorder %s24, 1
      %p147 = por %p145, %p146
      %p148 = scmp.ne.s32.totalorder %s139, %s140
      %p149 = scmp.eq.s32.totalorder %s24, 0
      %p150 = por %p148, %p149
      %p151 = scmp.ne.s32.totalorder %s139, %s140
      %p152 = scmp.eq.s32.totalorder %s25, 1
      %p153 = por %p151, %p152
      %p155 = scmp.ne.s32.totalorder %s140, %s154
      %p156 = scmp.eq.s32.totalorder %s25, 0
      %p157 = por %p155, %p156
      %s158 = ssub.s32 %s19, %s26
      %p159 = scmp.eq.s32.totalorder %s158, 0
      %s161 = sadd.s32 %s160, 1
      %s162 = scalar_select %p159, %s160, %s161
      %p165 = pneg %p159
      %p166 = scmp.eq.s32.totalorder %s19, 1
      %p167 = por %p165, %p166
      %p168 = scmp.ne.s32.totalorder %s160, %s163
      %p169 = scmp.eq.s32.totalorder %s19, 0
      %p170 = por %p168, %p169
      %p171 = scmp.ne.s32.totalorder %s160, %s163
      %p172 = scmp.eq.s32.totalorder %s24, 1
      %p173 = por %p171, %p172
      %p174 = scmp.ne.s32.totalorder %s163, %s164
      %p175 = scmp.eq.s32.totalorder %s24, 0
      %p176 = por %p174, %p175
      %p177 = scmp.ne.s32.totalorder %s163, %s164
      %p178 = scmp.eq.s32.totalorder %s25, 1
      %p179 = por %p177, %p178
      %p181 = scmp.ne.s32.totalorder %s164, %s180
      %p182 = scmp.eq.s32.totalorder %s25, 0
      %p183 = por %p181, %p182
      %p184 = scmp.le.s32.totalorder 1, %s19
      %p185 = scmp.lt.s32.totalorder %s19, 3
      %p186 = pnand %p184, %p185
      %p187 = pneg %p186
      // Predicated region
      $region9: #{tpu_custom_call.1} parent=5 // pred_check
        _
      $region10: #{tpu_custom_call.1} parent=5 // pred_check_branch
        %189 = sbr.rel (%p186) target = $region12
      $region11: #{tpu_custom_call.1} parent=5 // pred_region
        %s190 = ssub.s32 %s19, 1
        // Predicated region
        $region13: #{tpu_custom_call.1} parent=11 // pred_check
          %p191 = pneg %p66
        $region14: #{tpu_custom_call.1} parent=11 // pred_check_branch
          %193 = sbr.rel (%p191) target = $region16
        $region15: #{tpu_custom_call.1} parent=11 // pred_region
          _
        $region16: #{tpu_custom_call.1} parent=11 // pred_fallthru
          _
        // Predicated region
        $region17: #{tpu_custom_call.1} parent=11 // pred_check
          %p194 = pneg %p87
        $region18: #{tpu_custom_call.1} parent=11 // pred_check_branch
          %196 = sbr.rel (%p194) target = $region20
        $region19: #{tpu_custom_call.1} parent=11 // pred_region
          _
        $region20: #{tpu_custom_call.1} parent=11 // pred_fallthru
          _
        // Predicated region
        $region21: #{tpu_custom_call.1} parent=11 // pred_check
          %p197 = pneg %p108
        $region22: #{tpu_custom_call.1} parent=11 // pred_check_branch
          %199 = sbr.rel (%p197) target = $region24
        $region23: #{tpu_custom_call.1} parent=11 // pred_region
          _
        $region24: #{tpu_custom_call.1} parent=11 // pred_fallthru
          _
        // Predicated region
        $region25: #{tpu_custom_call.1} parent=11 // pred_check
          %p200 = pneg %p129
        $region26: #{tpu_custom_call.1} parent=11 // pred_check_branch
          %202 = sbr.rel (%p200) target = $region28
        $region27: #{tpu_custom_call.1} parent=11 // pred_region
          _
        $region28: #{tpu_custom_call.1} parent=11 // pred_fallthru
          _
        // Predicated region
        $region29: #{tpu_custom_call.1} parent=11 // pred_check
          %p203 = pneg %p150
        $region30: #{tpu_custom_call.1} parent=11 // pred_check_branch
          %205 = sbr.rel (%p203) target = $region32
        $region31: #{tpu_custom_call.1} parent=11 // pred_region
          %s207 = ssub.s32 16, 16
          %208 = vsyncadd [#allocation5], %s207
          %s210 = sshll.u32 %s5, 4
          %s211 = int_to_ptr.vmem [resolvable:$true] %s210
          %213 = dma.vmem_to_smem %s211, 16, [#allocation6], [#allocation5]
        $region32: #{tpu_custom_call.1} parent=11 // pred_fallthru
          _
      $region12: #{tpu_custom_call.1} parent=5 // pred_fallthru
        _
      %p214 = scmp.lt.s32.totalorder %s19, 2
      // Predicated region
      $region33: #{tpu_custom_call.1} parent=5 // pred_check
        %p215 = pneg %p214
      $region34: #{tpu_custom_call.1} parent=5 // pred_check_branch
        %217 = sbr.rel (%p215) target = $region36
      $region35: #{tpu_custom_call.1} parent=5 // pred_region
        // Predicated region
        $region37: #{tpu_custom_call.1} parent=35 // pred_check
          %p218 = pneg %p39
        $region38: #{tpu_custom_call.1} parent=35 // pred_check_branch
          %220 = sbr.rel (%p218) target = $region40
        $region39: #{tpu_custom_call.1} parent=35 // pred_region
          %s221 = sand.u32 %s29, 1
          %s222 = scalar_lea.sflag [#allocation3], %s221
          %s223 = sand.u32 %s29, 1
          %s224 = smul.addr %s223, 256
          %s225 = scalar_lea.vmem [#allocation2], %s224
          %s227 = ssub.s32 4096, 4096
          %228 = vsyncadd %s222, %s227
          %s229 = smul.addr %s19, 64
          %s230 = smul.addr %s229, 64
          %s231 = scalar_lea.hbm %s0, %s230
          %s232 = sshll.u32 %s225, 4
          %s233 = int_to_ptr.vmem [resolvable:$true] %s232
          %238 = dma.hbm_to_vmem [thread:$0]  %s231, 4096, %s233, %s222, 256, 256, 16
        $region40: #{tpu_custom_call.1} parent=35 // pred_fallthru
          _
      $region36: #{tpu_custom_call.1} parent=5 // pred_fallthru
        _
      %p239 = scmp.le.s32.totalorder 1, %s19
      %p240 = scmp.lt.s32.totalorder %s19, 3
      %p241 = pnand %p239, %p240
      %p242 = pneg %p241
      // Predicated region
      $region41: #{tpu_custom_call.1} parent=5 // pred_check
        _
      $region42: #{tpu_custom_call.1} parent=5 // pred_check_branch
        %244 = sbr.rel (%p241) target = $region44
      $region43: #{tpu_custom_call.1} parent=5 // pred_region
        %s245 = ssub.s32 %s19, 1
        %s246 = sand.u32 %s32, 1
        %s247 = scalar_lea.sflag [#allocation3], %s246
        %s248 = sand.u32 %s32, 1
        %s249 = smul.addr %s248, 256
        %s250 = scalar_lea.vmem [#allocation2], %s249
        // Predicated region
        $region45: #{tpu_custom_call.1} parent=43 // pred_check
          %p251 = pneg %p45
        $region46: #{tpu_custom_call.1} parent=43 // pred_check_branch
          %253 = sbr.rel (%p251) target = $region48
        $region47: #{tpu_custom_call.1} parent=43 // pred_region
          %254 = dma.done %s247, 4096
        $region48: #{tpu_custom_call.1} parent=43 // pred_fallthru
          _
        // Predicated region
        $region49: #{tpu_custom_call.1} parent=43 // pred_check
          %p255 = pneg %p150
        $region50: #{tpu_custom_call.1} parent=43 // pred_check_branch
          %257 = sbr.rel (%p255) target = $region52
        $region51: #{tpu_custom_call.1} parent=43 // pred_region
          %258 = dma.done [#allocation5], 16
        $region52: #{tpu_custom_call.1} parent=43 // pred_fallthru
          _
        %259 = sfence
        %s260 = sand.u32 %s32, 1
        %s261 = scalar_lea.sflag [#allocation3], %s260
        %s262 = sand.u32 %s32, 1
        %s263 = smul.addr %s262, 256
        %s264 = scalar_lea.vmem [#allocation2], %s263
        %p265 = pneg %p45
        %p266 = pneg %p42
        %p267 = pneg %p66
        %p268 = pneg %p63
        %p269 = pneg %p87
        %p270 = pneg %p84
        %p271 = pneg %p108
        %p272 = pneg %p105
        %p273 = pneg %p129
        %p274 = pneg %p126
        %p275 = pneg %p150
        %p276 = pneg %p147
        %p277 = pneg %p176
        %p278 = pneg %p173
        %s279 = sand.u32 %s163, 1
        %s280 = scalar_lea.sflag [#allocation4], %s279
        %s281 = sand.u32 %s163, 1
        %s282 = scalar_lea.vmem [#allocation7], %s281
        %v284 = vld [vmem:[%s1] sm:$0xf]
        %v285 = vld [vmem:[%s1 + $0x4] sm:$0xf]
        %v286 = vld [vmem:[%s1 + $0x8] sm:$0xf]
        %v287 = vld [vmem:[%s1 + $0xc] sm:$0xf]
        %v288 = vld [vmem:[%s1 + $0x10] sm:$0xf]
        %v289 = vld [vmem:[%s1 + $0x14] sm:$0xf]
        %v290 = vld [vmem:[%s1 + $0x18] sm:$0xf]
        %v291 = vld [vmem:[%s1 + $0x1c] sm:$0xf]
        %v292 = vld [vmem:[%s1 + $0x20] sm:$0xf]
        %v293 = vld [vmem:[%s1 + $0x24] sm:$0xf]
        %v294 = vld [vmem:[%s1 + $0x28] sm:$0xf]
        %v295 = vld [vmem:[%s1 + $0x2c] sm:$0xf]
        %v296 = vld [vmem:[%s1 + $0x30] sm:$0xf]
        %v297 = vld [vmem:[%s1 + $0x34] sm:$0xf]
        %v298 = vld [vmem:[%s1 + $0x38] sm:$0xf]
        %v299 = vld [vmem:[%s1 + $0x3c] sm:$0xf]
        %v300 = vld [vmem:[%s250] sm:$0xff]
        %v301 = vld [vmem:[%s250 + $0x8] sm:$0xff]
        %v302 = vld [vmem:[%s250 + $0x10] sm:$0xff]
        %v303 = vld [vmem:[%s250 + $0x18] sm:$0xff]
        %v304 = vld [vmem:[%s250 + $0x20] sm:$0xff]
        %v305 = vld [vmem:[%s250 + $0x28] sm:$0xff]
        %v306 = vld [vmem:[%s250 + $0x30] sm:$0xff]
        %v307 = vld [vmem:[%s250 + $0x38] sm:$0xff]
        %v308 = vld [vmem:[%s250 + $0x40] sm:$0xff]
        %v309 = vld [vmem:[%s250 + $0x48] sm:$0xff]
        %v310 = vld [vmem:[%s250 + $0x50] sm:$0xff]
        %v311 = vld [vmem:[%s250 + $0x58] sm:$0xff]
        %v312 = vld [vmem:[%s250 + $0x60] sm:$0xff]
        %v313 = vld [vmem:[%s250 + $0x68] sm:$0xff]
        %v314 = vld [vmem:[%s250 + $0x70] sm:$0xff]
        %v315 = vld [vmem:[%s250 + $0x78] sm:$0xff]
        %v316 = vld [vmem:[%s250 + $0x80] sm:$0xff]
        %v317 = vld [vmem:[%s250 + $0x88] sm:$0xff]
        %v318 = vld [vmem:[%s250 + $0x90] sm:$0xff]
        %v319 = vld [vmem:[%s250 + $0x98] sm:$0xff]
        %v320 = vld [vmem:[%s250 + $0xa0] sm:$0xff]
        %v321 = vld [vmem:[%s250 + $0xa8] sm:$0xff]
        %v322 = vld [vmem:[%s250 + $0xb0] sm:$0xff]
        %v323 = vld [vmem:[%s250 + $0xb8] sm:$0xff]
        %v324 = vld [vmem:[%s250 + $0xc0] sm:$0xff]
        %v325 = vld [vmem:[%s250 + $0xc8] sm:$0xff]
        %v326 = vld [vmem:[%s250 + $0xd0] sm:$0xff]
        %v327 = vld [vmem:[%s250 + $0xd8] sm:$0xff]
        %v328 = vld [vmem:[%s250 + $0xe0] sm:$0xff]
        %v329 = vld [vmem:[%s250 + $0xe8] sm:$0xff]
        %v330 = vld [vmem:[%s250 + $0xf0] sm:$0xff]
        %v331 = vld [vmem:[%s250 + $0xf8] sm:$0xff]
        %v332 = vld [vmem:[%s4] sm:$0xff]
        %v333 = vld [vmem:[%s4 + $0x8] sm:$0xff]
        %v334 = vld [vmem:[%s4 + $0x10] sm:$0xff]
        %v335 = vld [vmem:[%s4 + $0x18] sm:$0xff]
        %v336 = vld [vmem:[%s4 + $0x20] sm:$0xff]
        %v337 = vld [vmem:[%s4 + $0x28] sm:$0xff]
        %v338 = vld [vmem:[%s4 + $0x30] sm:$0xff]
        %v339 = vld [vmem:[%s4 + $0x38] sm:$0xff]
        %v340 = vld [vmem:[%s4 + $0x40] sm:$0xff]
        %v341 = vld [vmem:[%s4 + $0x48] sm:$0xff]
        %v342 = vld [vmem:[%s4 + $0x50] sm:$0xff]
        %v343 = vld [vmem:[%s4 + $0x58] sm:$0xff]
        %v344 = vld [vmem:[%s4 + $0x60] sm:$0xff]
        %v345 = vld [vmem:[%s4 + $0x68] sm:$0xff]
        %v346 = vld [vmem:[%s4 + $0x70] sm:$0xff]
        %v347 = vld [vmem:[%s4 + $0x78] sm:$0xff]
        %349 = vset.pattern.permute.xlu0 0
        %350 = vperm.xlu0 %349, %v332
        %v351 = vpop.permute.xlu0 %350
        %354 = vset.pattern.permute.xlu0 0
        %355 = vperm.xlu0 %354, %v333
        %v356 = vpop.permute.xlu0 %355
        %359 = vset.pattern.permute.xlu0 0
        %360 = vperm.xlu0 %359, %v334
        %v361 = vpop.permute.xlu0 %360
        %364 = vset.pattern.permute.xlu0 0
        %365 = vperm.xlu0 %364, %v335
        %v366 = vpop.permute.xlu0 %365
        %369 = vset.pattern.permute.xlu0 0
        %370 = vperm.xlu0 %369, %v336
        %v371 = vpop.permute.xlu0 %370
        %374 = vset.pattern.permute.xlu0 0
        %375 = vperm.xlu0 %374, %v337
        %v376 = vpop.permute.xlu0 %375
        %379 = vset.pattern.permute.xlu0 0
        %380 = vperm.xlu0 %379, %v338
        %v381 = vpop.permute.xlu0 %380
        %384 = vset.pattern.permute.xlu0 0
        %385 = vperm.xlu0 %384, %v339
        %v386 = vpop.permute.xlu0 %385
        %389 = vset.pattern.permute.xlu0 0
        %390 = vperm.xlu0 %389, %v340
        %v391 = vpop.permute.xlu0 %390
        %394 = vset.pattern.permute.xlu0 0
        %395 = vperm.xlu0 %394, %v341
        %v396 = vpop.permute.xlu0 %395
        %399 = vset.pattern.permute.xlu0 0
        %400 = vperm.xlu0 %399, %v342
        %v401 = vpop.permute.xlu0 %400
        %404 = vset.pattern.permute.xlu0 0
        %405 = vperm.xlu0 %404, %v343
        %v406 = vpop.permute.xlu0 %405
        %409 = vset.pattern.permute.xlu0 0
        %410 = vperm.xlu0 %409, %v344
        %v411 = vpop.permute.xlu0 %410
        %414 = vset.pattern.permute.xlu0 0
        %415 = vperm.xlu0 %414, %v345
        %v416 = vpop.permute.xlu0 %415
        %419 = vset.pattern.permute.xlu0 0
        %420 = vperm.xlu0 %419, %v346
        %v421 = vpop.permute.xlu0 %420
        %424 = vset.pattern.permute.xlu0 0
        %425 = vperm.xlu0 %424, %v347
        %v426 = vpop.permute.xlu0 %425
        %v444 = vunpack.c.l.b16 %v284
        %v445 = vunpack.c.l.b16 %v285
        %v446 = vunpack.c.l.b16 %v286
        %v447 = vunpack.c.l.b16 %v287
        %v448 = vunpack.c.l.b16 %v288
        %v449 = vunpack.c.l.b16 %v289
        %v450 = vunpack.c.l.b16 %v290
        %v451 = vunpack.c.l.b16 %v291
        %v452 = vunpack.c.l.b16 %v292
        %v453 = vunpack.c.l.b16 %v293
        %v454 = vunpack.c.l.b16 %v294
        %v455 = vunpack.c.l.b16 %v295
        %v456 = vunpack.c.l.b16 %v296
        %v457 = vunpack.c.l.b16 %v297
        %v458 = vunpack.c.l.b16 %v298
        %v459 = vunpack.c.l.b16 %v299
        %v460 = vpack.c.b16 %v445, %v444
        %v461 = vpack.c.b16 %v447, %v446
        %v462 = vpack.c.b16 %v449, %v448
        %v463 = vpack.c.b16 %v451, %v450
        %v464 = vpack.c.b16 %v453, %v452
        %v465 = vpack.c.b16 %v455, %v454
        %v466 = vpack.c.b16 %v457, %v456
        %v467 = vpack.c.b16 %v459, %v458
        %v508 = vunpack.c.l.b16 %v300
        %v509 = vunpack.c.h.b16 %v300
        %v510 = vunpack.c.l.b16 %v301
        %v511 = vunpack.c.h.b16 %v301
        %v512 = vunpack.c.l.b16 %v302
        %v513 = vunpack.c.h.b16 %v302
        %v514 = vunpack.c.l.b16 %v303
        %v515 = vunpack.c.h.b16 %v303
        %v516 = vunpack.c.l.b16 %v304
        %v517 = vunpack.c.h.b16 %v304
        %v518 = vunpack.c.l.b16 %v305
        %v519 = vunpack.c.h.b16 %v305
        %v520 = vunpack.c.l.b16 %v306
        %v521 = vunpack.c.h.b16 %v306
        %v522 = vunpack.c.l.b16 %v307
        %v523 = vunpack.c.h.b16 %v307
        %v524 = vunpack.c.l.b16 %v308
        %v525 = vunpack.c.h.b16 %v308
        %v526 = vunpack.c.l.b16 %v309
        %v527 = vunpack.c.h.b16 %v309
        %v528 = vunpack.c.l.b16 %v310
        %v529 = vunpack.c.h.b16 %v310
        %v530 = vunpack.c.l.b16 %v311
        %v531 = vunpack.c.h.b16 %v311
        %v532 = vunpack.c.l.b16 %v312
        %v533 = vunpack.c.h.b16 %v312
        %v534 = vunpack.c.l.b16 %v313
        %v535 = vunpack.c.h.b16 %v313
        %v536 = vunpack.c.l.b16 %v314
        %v537 = vunpack.c.h.b16 %v314
        %v538 = vunpack.c.l.b16 %v315
        %v539 = vunpack.c.h.b16 %v315
        %v540 = vunpack.c.l.b16 %v316
        %v541 = vunpack.c.h.b16 %v316
        %v542 = vunpack.c.l.b16 %v317
        %v543 = vunpack.c.h.b16 %v317
        %v544 = vunpack.c.l.b16 %v318
        %v545 = vunpack.c.h.b16 %v318
        %v546 = vunpack.c.l.b16 %v319
        %v547 = vunpack.c.h.b16 %v319
        %v548 = vunpack.c.l.b16 %v320
        %v549 = vunpack.c.h.b16 %v320
        %v550 = vunpack.c.l.b16 %v321
        %v551 = vunpack.c.h.b16 %v321
        %v552 = vunpack.c.l.b16 %v322
        %v553 = vunpack.c.h.b16 %v322
        %v554 = vunpack.c.l.b16 %v323
        %v555 = vunpack.c.h.b16 %v323
        %v556 = vunpack.c.l.b16 %v324
        %v557 = vunpack.c.h.b16 %v324
        %v558 = vunpack.c.l.b16 %v325
        %v559 = vunpack.c.h.b16 %v325
        %v560 = vunpack.c.l.b16 %v326
        %v561 = vunpack.c.h.b16 %v326
        %v562 = vunpack.c.l.b16 %v327
        %v563 = vunpack.c.h.b16 %v327
        %v564 = vunpack.c.l.b16 %v328
        %v565 = vunpack.c.h.b16 %v328
        %v566 = vunpack.c.l.b16 %v329
        %v567 = vunpack.c.h.b16 %v329
        %v568 = vunpack.c.l.b16 %v330
        %v569 = vunpack.c.h.b16 %v330
        %v570 = vunpack.c.l.b16 %v331
        %v571 = vunpack.c.h.b16 %v331
        %v572 = vpack.c.b16 %v512, %v508
        %v573 = vpack.c.b16 %v513, %v509
        %v574 = vpack.c.b16 %v514, %v510
        %v575 = vpack.c.b16 %v515, %v511
        %v576 = vpack.c.b16 %v520, %v516
        %v577 = vpack.c.b16 %v521, %v517
        %v578 = vpack.c.b16 %v522, %v518
        %v579 = vpack.c.b16 %v523, %v519
        %v580 = vpack.c.b16 %v528, %v524
        %v581 = vpack.c.b16 %v529, %v525
        %v582 = vpack.c.b16 %v530, %v526
        %v583 = vpack.c.b16 %v531, %v527
        %v584 = vpack.c.b16 %v536, %v532
        %v585 = vpack.c.b16 %v537, %v533
        %v586 = vpack.c.b16 %v538, %v534
        %v587 = vpack.c.b16 %v539, %v535
        %v588 = vpack.c.b16 %v544, %v540
        %v589 = vpack.c.b16 %v545, %v541
        %v590 = vpack.c.b16 %v546, %v542
        %v591 = vpack.c.b16 %v547, %v543
        %v592 = vpack.c.b16 %v552, %v548
        %v593 = vpack.c.b16 %v553, %v549
        %v594 = vpack.c.b16 %v554, %v550
        %v595 = vpack.c.b16 %v555, %v551
        %v596 = vpack.c.b16 %v560, %v556
        %v597 = vpack.c.b16 %v561, %v557
        %v598 = vpack.c.b16 %v562, %v558
        %v599 = vpack.c.b16 %v563, %v559
        %v600 = vpack.c.b16 %v568, %v564
        %v601 = vpack.c.b16 %v569, %v565
        %v602 = vpack.c.b16 %v570, %v566
        %v603 = vpack.c.b16 %v571, %v567
        %636 = vmatprep.subr.bf16.mxu0 %v573
        %637 = vmatpush1.bf16.msra.mxu0 %v572
        %638 = vmatprep.subr.bf16.mxu0 %v577
        %639 = vmatpush1.bf16.msra.mxu0 %v576
        %640 = vmatprep.subr.bf16.mxu0 %v581
        %641 = vmatpush1.bf16.msra.mxu0 %v580
        %642 = vmatprep.subr.bf16.mxu0 %v585
        %643 = vmatpush1.bf16.msra.mxu0 %v584
        %644 = vmatprep.subr.bf16.mxu0 %v589
        %645 = vmatpush1.bf16.msra.mxu0 %v588
        %646 = vmatprep.subr.bf16.mxu0 %v593
        %647 = vmatpush1.bf16.msra.mxu0 %v592
        %648 = vmatprep.subr.bf16.mxu0 %v597
        %649 = vmatpush1.bf16.msra.mxu0 %v596
        %650 = vmatprep.subr.bf16.mxu0 %v601
        %651 = vmatpush1.bf16.msra.mxu0 %v600
        %652 = vmatprep.subr.bf16.mxu0 0
        %653 = vmatpush1.bf16.msra.mxu0 0
        %654 = vmatprep.subr.bf16.mxu0 0
        %655 = vmatpush1.bf16.msra.mxu0 0
        %656 = vmatprep.subr.bf16.mxu0 0
        %657 = vmatpush1.bf16.msra.mxu0 0
        %658 = vmatprep.subr.bf16.mxu0 0
        %659 = vmatpush1.bf16.msra.mxu0 0
        %660 = vmatprep.subr.bf16.mxu0 0
        %661 = vmatpush1.bf16.msra.mxu0 0
        %662 = vmatprep.subr.bf16.mxu0 0
        %663 = vmatpush1.bf16.msra.mxu0 0
        %664 = vmatprep.subr.bf16.mxu0 0
        %665 = vmatpush1.bf16.msra.mxu0 0
        %666 = vmatprep.subr.bf16.mxu0 0
        %667 = vmatpush1.bf16.msra.mxu0 0
        %668 = vmatprep.mubr.bf16.mxu0 0
        %669 = vmatmul.mubr.bf16.gmra.mrb[0].mxu0 %v460
        %v670 = vpop.f32.mrb[0].mxu0
        %v671 = vadd.f32 %v351, %v670
        %v672 = vpop.f32.mrb[0].mxu0
        %v673 = vadd.f32 %v351, %v672
        %v674 = vpop.f32.mrb[0].mxu0
        %v675 = vadd.f32 %v356, %v674
        %v676 = vpop.f32.mrb[0].mxu0
        %v677 = vadd.f32 %v356, %v676
        %678 = vmatprep.mubr.bf16.mxu0 0
        %679 = vmatmul.mubr.bf16.gmra.mrb[0].mxu0 %v461
        %v680 = vpop.f32.mrb[0].mxu0
        %v681 = vadd.f32 %v361, %v680
        %v682 = vpop.f32.mrb[0].mxu0
        %v683 = vadd.f32 %v361, %v682
        %v684 = vpop.f32.mrb[0].mxu0
        %v685 = vadd.f32 %v366, %v684
        %v686 = vpop.f32.mrb[0].mxu0
        %v687 = vadd.f32 %v366, %v686
        %688 = vmatprep.mubr.bf16.mxu0 0
        %689 = vmatmul.mubr.bf16.gmra.mrb[0].mxu0 %v462
        %v690 = vpop.f32.mrb[0].mxu0
        %v691 = vadd.f32 %v371, %v690
        %v692 = vpop.f32.mrb[0].mxu0
        %v693 = vadd.f32 %v371, %v692
        %v694 = vpop.f32.mrb[0].mxu0
        %v695 = vadd.f32 %v376, %v694
        %v696 = vpop.f32.mrb[0].mxu0
        %v697 = vadd.f32 %v376, %v696
        %698 = vmatprep.mubr.bf16.mxu0 0
        %699 = vmatmul.mubr.bf16.gmra.mrb[0].mxu0 %v463
        %v700 = vpop.f32.mrb[0].mxu0
        %v701 = vadd.f32 %v381, %v700
        %v702 = vpop.f32.mrb[0].mxu0
        %v703 = vadd.f32 %v381, %v702
        %v704 = vpop.f32.mrb[0].mxu0
        %v705 = vadd.f32 %v386, %v704
        %v706 = vpop.f32.mrb[0].mxu0
        %v707 = vadd.f32 %v386, %v706
        %708 = vmatprep.mubr.bf16.mxu0 0
        %709 = vmatmul.mubr.bf16.gmra.mrb[0].mxu0 %v464
        %v710 = vpop.f32.mrb[0].mxu0
        %v711 = vadd.f32 %v391, %v710
        %v712 = vpop.f32.mrb[0].mxu0
        %v713 = vadd.f32 %v391, %v712
        %v714 = vpop.f32.mrb[0].mxu0
        %v715 = vadd.f32 %v396, %v714
        %v716 = vpop.f32.mrb[0].mxu0
        %v717 = vadd.f32 %v396, %v716
        %718 = vmatprep.mubr.bf16.mxu0 0
        %719 = vmatmul.mubr.bf16.gmra.mrb[0].mxu0 %v465
        %v720 = vpop.f32.mrb[0].mxu0
        %v721 = vadd.f32 %v401, %v720
        %v722 = vpop.f32.mrb[0].mxu0
        %v723 = vadd.f32 %v401, %v722
        %v724 = vpop.f32.mrb[0].mxu0
        %v725 = vadd.f32 %v406, %v724
        %v726 = vpop.f32.mrb[0].mxu0
        %v727 = vadd.f32 %v406, %v726
        %728 = vmatprep.mubr.bf16.mxu0 0
        %729 = vmatmul.mubr.bf16.gmra.mrb[0].mxu0 %v466
        %v730 = vpop.f32.mrb[0].mxu0
        %v731 = vadd.f32 %v411, %v730
        %v732 = vpop.f32.mrb[0].mxu0
        %v733 = vadd.f32 %v411, %v732
        %v734 = vpop.f32.mrb[0].mxu0
        %v735 = vadd.f32 %v416, %v734
        %v736 = vpop.f32.mrb[0].mxu0
        %v737 = vadd.f32 %v416, %v736
        %738 = vmatprep.mubr.bf16.mxu0 0
        %739 = vmatmul.mubr.bf16.gmra.mrb[0].mxu0 %v467
        %v740 = vpop.f32.mrb[0].mxu0
        %v741 = vadd.f32 %v421, %v740
        %v742 = vpop.f32.mrb[0].mxu0
        %v743 = vadd.f32 %v421, %v742
        %v744 = vpop.f32.mrb[0].mxu0
        %v745 = vadd.f32 %v426, %v744
        %v746 = vpop.f32.mrb[0].mxu0
        %v747 = vadd.f32 %v426, %v746
        %748 = vdwg.mxu0
        %749 = vmatprep.subr.bf16.mxu0 %v575
        %750 = vmatpush1.bf16.msra.mxu0 %v574
        %751 = vmatprep.subr.bf16.mxu0 %v579
        %752 = vmatpush1.bf16.msra.mxu0 %v578
        %753 = vmatprep.subr.bf16.mxu0 %v583
        %754 = vmatpush1.bf16.msra.mxu0 %v582
        %755 = vmatprep.subr.bf16.mxu0 %v587
        %756 = vmatpush1.bf16.msra.mxu0 %v586
        %757 = vmatprep.subr.bf16.mxu0 %v591
        %758 = vmatpush1.bf16.msra.mxu0 %v590
        %759 = vmatprep.subr.bf16.mxu0 %v595
        %760 = vmatpush1.bf16.msra.mxu0 %v594
        %761 = vmatprep.subr.bf16.mxu0 %v599
        %762 = vmatpush1.bf16.msra.mxu0 %v598
        %763 = vmatprep.subr.bf16.mxu0 %v603
        %764 = vmatpush1.bf16.msra.mxu0 %v602
        %765 = vmatprep.subr.bf16.mxu0 0
        %766 = vmatpush1.bf16.msra.mxu0 0
        %767 = vmatprep.subr.bf16.mxu0 0
        %768 = vmatpush1.bf16.msra.mxu0 0
        %769 = vmatprep.subr.bf16.mxu0 0
        %770 = vmatpush1.bf16.msra.mxu0 0
        %771 = vmatprep.subr.bf16.mxu0 0
        %772 = vmatpush1.bf16.msra.mxu0 0
        %773 = vmatprep.subr.bf16.mxu0 0
        %774 = vmatpush1.bf16.msra.mxu0 0
        %775 = vmatprep.subr.bf16.mxu0 0
        %776 = vmatpush1.bf16.msra.mxu0 0
        %777 = vmatprep.subr.bf16.mxu0 0
        %778 = vmatpush1.bf16.msra.mxu0 0
        %779 = vmatprep.subr.bf16.mxu0 0
        %780 = vmatpush1.bf16.msra.mxu0 0
        %781 = vmatprep.mubr.bf16.mxu0 0
        %782 = vmatmul.mubr.bf16.gmra.mrb[0].mxu0 %v460
        %v783 = vpop.f32.mrb[0].mxu0
        %v784 = vadd.f32 %v351, %v783
        %v785 = vpop.f32.mrb[0].mxu0
        %v786 = vadd.f32 %v351, %v785
        %v787 = vpop.f32.mrb[0].mxu0
        %v788 = vadd.f32 %v356, %v787
        %v789 = vpop.f32.mrb[0].mxu0
        %v790 = vadd.f32 %v356, %v789
        %791 = vmatprep.mubr.bf16.mxu0 0
        %792 = vmatmul.mubr.bf16.gmra.mrb[0].mxu0 %v461
        %v793 = vpop.f32.mrb[0].mxu0
        %v794 = vadd.f32 %v361, %v793
        %v795 = vpop.f32.mrb[0].mxu0
        %v796 = vadd.f32 %v361, %v795
        %v797 = vpop.f32.mrb[0].mxu0
        %v798 = vadd.f32 %v366, %v797
        %v799 = vpop.f32.mrb[0].mxu0
        %v800 = vadd.f32 %v366, %v799
        %801 = vmatprep.mubr.bf16.mxu0 0
        %802 = vmatmul.mubr.bf16.gmra.mrb[0].mxu0 %v462
        %v803 = vpop.f32.mrb[0].mxu0
        %v804 = vadd.f32 %v371, %v803
        %v805 = vpop.f32.mrb[0].mxu0
        %v806 = vadd.f32 %v371, %v805
        %v807 = vpop.f32.mrb[0].mxu0
        %v808 = vadd.f32 %v376, %v807
        %v809 = vpop.f32.mrb[0].mxu0
        %v810 = vadd.f32 %v376, %v809
        %811 = vmatprep.mubr.bf16.mxu0 0
        %812 = vmatmul.mubr.bf16.gmra.mrb[0].mxu0 %v463
        %v813 = vpop.f32.mrb[0].mxu0
        %v814 = vadd.f32 %v381, %v813
        %v815 = vpop.f32.mrb[0].mxu0
        %v816 = vadd.f32 %v381, %v815
        %v817 = vpop.f32.mrb[0].mxu0
        %v818 = vadd.f32 %v386, %v817
        %v819 = vpop.f32.mrb[0].mxu0
        %v820 = vadd.f32 %v386, %v819
        %821 = vmatprep.mubr.bf16.mxu0 0
        %822 = vmatmul.mubr.bf16.gmra.mrb[0].mxu0 %v464
        %v823 = vpop.f32.mrb[0].mxu0
        %v824 = vadd.f32 %v391, %v823
        %v825 = vpop.f32.mrb[0].mxu0
        %v826 = vadd.f32 %v391, %v825
        %v827 = vpop.f32.mrb[0].mxu0
        %v828 = vadd.f32 %v396, %v827
        %v829 = vpop.f32.mrb[0].mxu0
        %v830 = vadd.f32 %v396, %v829
        %831 = vmatprep.mubr.bf16.mxu0 0
        %832 = vmatmul.mubr.bf16.gmra.mrb[0].mxu0 %v465
        %v833 = vpop.f32.mrb[0].mxu0
        %v834 = vadd.f32 %v401, %v833
        %v835 = vpop.f32.mrb[0].mxu0
        %v836 = vadd.f32 %v401, %v835
        %v837 = vpop.f32.mrb[0].mxu0
        %v838 = vadd.f32 %v406, %v837
        %v839 = vpop.f32.mrb[0].mxu0
        %v840 = vadd.f32 %v406, %v839
        %841 = vmatprep.mubr.bf16.mxu0 0
        %842 = vmatmul.mubr.bf16.gmra.mrb[0].mxu0 %v466
        %v843 = vpop.f32.mrb[0].mxu0
        %v844 = vadd.f32 %v411, %v843
        %v845 = vpop.f32.mrb[0].mxu0
        %v846 = vadd.f32 %v411, %v845
        %v847 = vpop.f32.mrb[0].mxu0
        %v848 = vadd.f32 %v416, %v847
        %v849 = vpop.f32.mrb[0].mxu0
        %v850 = vadd.f32 %v416, %v849
        %851 = vmatprep.mubr.bf16.mxu0 0
        %852 = vmatmul.mubr.bf16.gmra.mrb[0].mxu0 %v467
        %v853 = vpop.f32.mrb[0].mxu0
        %v854 = vadd.f32 %v421, %v853
        %v855 = vpop.f32.mrb[0].mxu0
        %v856 = vadd.f32 %v421, %v855
        %v857 = vpop.f32.mrb[0].mxu0
        %v858 = vadd.f32 %v426, %v857
        %v859 = vpop.f32.mrb[0].mxu0
        %v860 = vadd.f32 %v426, %v859
        %861 = vdwg.mxu0
        %v862 = vld [vmem:[%s2] sm:$0xf]
        %v863 = vld [vmem:[%s2 + $0x4] sm:$0xf]
        %v864 = vld [vmem:[%s2 + $0x8] sm:$0xf]
        %v865 = vld [vmem:[%s2 + $0xc] sm:$0xf]
        %v866 = vld [vmem:[%s2 + $0x10] sm:$0xf]
        %v867 = vld [vmem:[%s2 + $0x14] sm:$0xf]
        %v868 = vld [vmem:[%s2 + $0x18] sm:$0xf]
        %v869 = vld [vmem:[%s2 + $0x1c] sm:$0xf]
        %v870 = vld [vmem:[%s2 + $0x20] sm:$0xf]
        %v871 = vld [vmem:[%s2 + $0x24] sm:$0xf]
        %v872 = vld [vmem:[%s2 + $0x28] sm:$0xf]
        %v873 = vld [vmem:[%s2 + $0x2c] sm:$0xf]
        %v874 = vld [vmem:[%s2 + $0x30] sm:$0xf]
        %v875 = vld [vmem:[%s2 + $0x34] sm:$0xf]
        %v876 = vld [vmem:[%s2 + $0x38] sm:$0xf]
        %v877 = vld [vmem:[%s2 + $0x3c] sm:$0xf]
        %v878 = vtanh.pop %v671
        %v879 = vtanh.pop %v675
        %v880 = vtanh.pop %v681
        %v881 = vtanh.pop %v685
        %v882 = vtanh.pop %v691
        %v883 = vtanh.pop %v695
        %v884 = vtanh.pop %v701
        %v885 = vtanh.pop %v705
        %v886 = vtanh.pop %v711
        %v887 = vtanh.pop %v715
        %v888 = vtanh.pop %v721
        %v889 = vtanh.pop %v725
        %v890 = vtanh.pop %v731
        %v891 = vtanh.pop %v735
        %v892 = vtanh.pop %v741
        %v893 = vtanh.pop %v745
        %v894 = vpack.c.bf16 %v879, %v878
        %v895 = vpack.c.bf16 %v881, %v880
        %v896 = vpack.c.bf16 %v883, %v882
        %v897 = vpack.c.bf16 %v885, %v884
        %v898 = vpack.c.bf16 %v887, %v886
        %v899 = vpack.c.bf16 %v889, %v888
        %v900 = vpack.c.bf16 %v891, %v890
        %v901 = vpack.c.bf16 %v893, %v892
        %v918 = vunpack.c.l.b16 %v862
        %v919 = vunpack.c.l.b16 %v863
        %v920 = vunpack.c.l.b16 %v864
        %v921 = vunpack.c.l.b16 %v865
        %v922 = vunpack.c.l.b16 %v866
        %v923 = vunpack.c.l.b16 %v867
        %v924 = vunpack.c.l.b16 %v868
        %v925 = vunpack.c.l.b16 %v869
        %v926 = vunpack.c.l.b16 %v870
        %v927 = vunpack.c.l.b16 %v871
        %v928 = vunpack.c.l.b16 %v872
        %v929 = vunpack.c.l.b16 %v873
        %v930 = vunpack.c.l.b16 %v874
        %v931 = vunpack.c.l.b16 %v875
        %v932 = vunpack.c.l.b16 %v876
        %v933 = vunpack.c.l.b16 %v877
        %v934 = vpack.c.b16 %v919, %v918
        %v935 = vpack.c.b16 %v921, %v920
        %v936 = vpack.c.b16 %v923, %v922
        %v937 = vpack.c.b16 %v925, %v924
        %v938 = vpack.c.b16 %v927, %v926
        %v939 = vpack.c.b16 %v929, %v928
        %v940 = vpack.c.b16 %v931, %v930
        %v941 = vpack.c.b16 %v933, %v932
        %950 = vmatprep.subr.bf16.mxu0 0
        %951 = vmatpush1.bf16.msra.mxu0 %v894
        %952 = vmatprep.subr.bf16.mxu0 0
        %953 = vmatpush1.bf16.msra.mxu0 %v895
        %954 = vmatprep.subr.bf16.mxu0 0
        %955 = vmatpush1.bf16.msra.mxu0 %v896
        %956 = vmatprep.subr.bf16.mxu0 0
        %957 = vmatpush1.bf16.msra.mxu0 %v897
        %958 = vmatprep.subr.bf16.mxu0 0
        %959 = vmatpush1.bf16.msra.mxu0 %v898
        %960 = vmatprep.subr.bf16.mxu0 0
        %961 = vmatpush1.bf16.msra.mxu0 %v899
        %962 = vmatprep.subr.bf16.mxu0 0
        %963 = vmatpush1.bf16.msra.mxu0 %v900
        %964 = vmatprep.subr.bf16.mxu0 0
        %965 = vmatpush1.bf16.msra.mxu0 %v901
        %966 = vmatprep.subr.bf16.mxu0 0
        %967 = vmatpush1.bf16.msra.mxu0 0
        %968 = vmatprep.subr.bf16.mxu0 0
        %969 = vmatpush1.bf16.msra.mxu0 0
        %970 = vmatprep.subr.bf16.mxu0 0
        %971 = vmatpush1.bf16.msra.mxu0 0
        %972 = vmatprep.subr.bf16.mxu0 0
        %973 = vmatpush1.bf16.msra.mxu0 0
        %974 = vmatprep.subr.bf16.mxu0 0
        %975 = vmatpush1.bf16.msra.mxu0 0
        %976 = vmatprep.subr.bf16.mxu0 0
        %977 = vmatpush1.bf16.msra.mxu0 0
        %978 = vmatprep.subr.bf16.mxu0 0
        %979 = vmatpush1.bf16.msra.mxu0 0
        %980 = vmatprep.subr.bf16.mxu0 0
        %981 = vmatpush1.bf16.msra.mxu0 0
        %982 = vmatprep.mubr.bf16.mxu0 0
        %983 = vmatmul.mubr.bf16.gmra.mrb[0].mxu0 %v934
        %v984 = vpop.f32.mrb[0].mxu0
        %v985 = vadd.f32 0.0, %v984
        %v986 = vpop.f32.mrb[0].mxu0
        %v987 = vpop.f32.mrb[0].mxu0
        %v988 = vadd.f32 0.0, %v987
        %v989 = vpop.f32.mrb[0].mxu0
        %990 = vmatprep.mubr.bf16.mxu0 0
        %991 = vmatmul.mubr.bf16.gmra.mrb[0].mxu0 %v935
        %v992 = vpop.f32.mrb[0].mxu0
        %v993 = vadd.f32 0.0, %v992
        %v994 = vpop.f32.mrb[0].mxu0
        %v995 = vpop.f32.mrb[0].mxu0
        %v996 = vadd.f32 0.0, %v995
        %v997 = vpop.f32.mrb[0].mxu0
        %998 = vmatprep.mubr.bf16.mxu0 0
        %999 = vmatmul.mubr.bf16.gmra.mrb[0].mxu0 %v936
        %v1000 = vpop.f32.mrb[0].mxu0
        %v1001 = vadd.f32 0.0, %v1000
        %v1002 = vpop.f32.mrb[0].mxu0
        %v1003 = vpop.f32.mrb[0].mxu0
        %v1004 = vadd.f32 0.0, %v1003
        %v1005 = vpop.f32.mrb[0].mxu0
        %1006 = vmatprep.mubr.bf16.mxu0 0
        %1007 = vmatmul.mubr.bf16.gmra.mrb[0].mxu0 %v937
        %v1008 = vpop.f32.mrb[0].mxu0
        %v1009 = vadd.f32 0.0, %v1008
        %v1010 = vpop.f32.mrb[0].mxu0
        %v1011 = vpop.f32.mrb[0].mxu0
        %v1012 = vadd.f32 0.0, %v1011
        %v1013 = vpop.f32.mrb[0].mxu0
        %1014 = vmatprep.mubr.bf16.mxu0 0
        %1015 = vmatmul.mubr.bf16.gmra.mrb[0].mxu0 %v938
        %v1016 = vpop.f32.mrb[0].mxu0
        %v1017 = vadd.f32 0.0, %v1016
        %v1018 = vpop.f32.mrb[0].mxu0
        %v1019 = vpop.f32.mrb[0].mxu0
        %v1020 = vadd.f32 0.0, %v1019
        %v1021 = vpop.f32.mrb[0].mxu0
        %1022 = vmatprep.mubr.bf16.mxu0 0
        %1023 = vmatmul.mubr.bf16.gmra.mrb[0].mxu0 %v939
        %v1024 = vpop.f32.mrb[0].mxu0
        %v1025 = vadd.f32 0.0, %v1024
        %v1026 = vpop.f32.mrb[0].mxu0
        %v1027 = vpop.f32.mrb[0].mxu0
        %v1028 = vadd.f32 0.0, %v1027
        %v1029 = vpop.f32.mrb[0].mxu0
        %1030 = vmatprep.mubr.bf16.mxu0 0
        %1031 = vmatmul.mubr.bf16.gmra.mrb[0].mxu0 %v940
        %v1032 = vpop.f32.mrb[0].mxu0
        %v1033 = vadd.f32 0.0, %v1032
        %v1034 = vpop.f32.mrb[0].mxu0
        %v1035 = vpop.f32.mrb[0].mxu0
        %v1036 = vadd.f32 0.0, %v1035
        %v1037 = vpop.f32.mrb[0].mxu0
        %1038 = vmatprep.mubr.bf16.mxu0 0
        %1039 = vmatmul.mubr.bf16.gmra.mrb[0].mxu0 %v941
        %v1040 = vpop.f32.mrb[0].mxu0
        %v1041 = vadd.f32 0.0, %v1040
        %v1042 = vpop.f32.mrb[0].mxu0
        %v1043 = vpop.f32.mrb[0].mxu0
        %v1044 = vadd.f32 0.0, %v1043
        %v1045 = vpop.f32.mrb[0].mxu0
        %1046 = vdwg.mxu0
        %v1047 = vadd.f32 %v673, %v985
        %v1048 = vadd.f32 %v677, %v988
        %v1049 = vadd.f32 %v683, %v993
        %v1050 = vadd.f32 %v687, %v996
        %v1051 = vadd.f32 %v693, %v1001
        %v1052 = vadd.f32 %v697, %v1004
        %v1053 = vadd.f32 %v703, %v1009
        %v1054 = vadd.f32 %v707, %v1012
        %v1055 = vadd.f32 %v713, %v1017
        %v1056 = vadd.f32 %v717, %v1020
        %v1057 = vadd.f32 %v723, %v1025
        %v1058 = vadd.f32 %v727, %v1028
        %v1059 = vadd.f32 %v733, %v1033
        %v1060 = vadd.f32 %v737, %v1036
        %v1061 = vadd.f32 %v743, %v1041
        %v1062 = vadd.f32 %v747, %v1044
        %v1063 = vtanh.pop %v1047
        %v1064 = vtanh.pop %v1048
        %v1065 = vtanh.pop %v1049
        %v1066 = vtanh.pop %v1050
        %v1067 = vtanh.pop %v1051
        %v1068 = vtanh.pop %v1052
        %v1069 = vtanh.pop %v1053
        %v1070 = vtanh.pop %v1054
        %v1071 = vtanh.pop %v1055
        %v1072 = vtanh.pop %v1056
        %v1073 = vtanh.pop %v1057
        %v1074 = vtanh.pop %v1058
        %v1075 = vtanh.pop %v1059
        %v1076 = vtanh.pop %v1060
        %v1077 = vtanh.pop %v1061
        %v1078 = vtanh.pop %v1062
        %v1079 = vpack.c.bf16 %v1064, %v1063
        %v1080 = vpack.c.bf16 %v1066, %v1065
        %v1081 = vpack.c.bf16 %v1068, %v1067
        %v1082 = vpack.c.bf16 %v1070, %v1069
        %v1083 = vpack.c.bf16 %v1072, %v1071
        %v1084 = vpack.c.bf16 %v1074, %v1073
        %v1085 = vpack.c.bf16 %v1076, %v1075
        %v1086 = vpack.c.bf16 %v1078, %v1077
        %1087 = vmatprep.subr.bf16.mxu0 0
        %1088 = vmatpush1.bf16.msra.mxu0 %v1079
        %1089 = vmatprep.subr.bf16.mxu0 0
        %1090 = vmatpush1.bf16.msra.mxu0 %v1080
        %1091 = vmatprep.subr.bf16.mxu0 0
        %1092 = vmatpush1.bf16.msra.mxu0 %v1081
        %1093 = vmatprep.subr.bf16.mxu0 0
        %1094 = vmatpush1.bf16.msra.mxu0 %v1082
        %1095 = vmatprep.subr.bf16.mxu0 0
        %1096 = vmatpush1.bf16.msra.mxu0 %v1083
        %1097 = vmatprep.subr.bf16.mxu0 0
        %1098 = vmatpush1.bf16.msra.mxu0 %v1084
        %1099 = vmatprep.subr.bf16.mxu0 0
        %1100 = vmatpush1.bf16.msra.mxu0 %v1085
        %1101 = vmatprep.subr.bf16.mxu0 0
        %1102 = vmatpush1.bf16.msra.mxu0 %v1086
        %1103 = vmatprep.subr.bf16.mxu0 0
        %1104 = vmatpush1.bf16.msra.mxu0 0
        %1105 = vmatprep.subr.bf16.mxu0 0
        %1106 = vmatpush1.bf16.msra.mxu0 0
        %1107 = vmatprep.subr.bf16.mxu0 0
        %1108 = vmatpush1.bf16.msra.mxu0 0
        %1109 = vmatprep.subr.bf16.mxu0 0
        %1110 = vmatpush1.bf16.msra.mxu0 0
        %1111 = vmatprep.subr.bf16.mxu0 0
        %1112 = vmatpush1.bf16.msra.mxu0 0
        %1113 = vmatprep.subr.bf16.mxu0 0
        %1114 = vmatpush1.bf16.msra.mxu0 0
        %1115 = vmatprep.subr.bf16.mxu0 0
        %1116 = vmatpush1.bf16.msra.mxu0 0
        %1117 = vmatprep.subr.bf16.mxu0 0
        %1118 = vmatpush1.bf16.msra.mxu0 0
        %1119 = vmatprep.mubr.bf16.mxu0 0
        %1120 = vmatmul.mubr.bf16.gmra.mrb[0].mxu0 %v934
        %v1121 = vpop.f32.mrb[0].mxu0
        %v1122 = vadd.f32 0.0, %v1121
        %v1123 = vpop.f32.mrb[0].mxu0
        %v1124 = vpop.f32.mrb[0].mxu0
        %v1125 = vadd.f32 0.0, %v1124
        %v1126 = vpop.f32.mrb[0].mxu0
        %1127 = vmatprep.mubr.bf16.mxu0 0
        %1128 = vmatmul.mubr.bf16.gmra.mrb[0].mxu0 %v935
        %v1129 = vpop.f32.mrb[0].mxu0
        %v1130 = vadd.f32 0.0, %v1129
        %v1131 = vpop.f32.mrb[0].mxu0
        %v1132 = vpop.f32.mrb[0].mxu0
        %v1133 = vadd.f32 0.0, %v1132
        %v1134 = vpop.f32.mrb[0].mxu0
        %1135 = vmatprep.mubr.bf16.mxu0 0
        %1136 = vmatmul.mubr.bf16.gmra.mrb[0].mxu0 %v936
        %v1137 = vpop.f32.mrb[0].mxu0
        %v1138 = vadd.f32 0.0, %v1137
        %v1139 = vpop.f32.mrb[0].mxu0
        %v1140 = vpop.f32.mrb[0].mxu0
        %v1141 = vadd.f32 0.0, %v1140
        %v1142 = vpop.f32.mrb[0].mxu0
        %1143 = vmatprep.mubr.bf16.mxu0 0
        %1144 = vmatmul.mubr.bf16.gmra.mrb[0].mxu0 %v937
        %v1145 = vpop.f32.mrb[0].mxu0
        %v1146 = vadd.f32 0.0, %v1145
        %v1147 = vpop.f32.mrb[0].mxu0
        %v1148 = vpop.f32.mrb[0].mxu0
        %v1149 = vadd.f32 0.0, %v1148
        %v1150 = vpop.f32.mrb[0].mxu0
        %1151 = vmatprep.mubr.bf16.mxu0 0
        %1152 = vmatmul.mubr.bf16.gmra.mrb[0].mxu0 %v938
        %v1153 = vpop.f32.mrb[0].mxu0
        %v1154 = vadd.f32 0.0, %v1153
        %v1155 = vpop.f32.mrb[0].mxu0
        %v1156 = vpop.f32.mrb[0].mxu0
        %v1157 = vadd.f32 0.0, %v1156
        %v1158 = vpop.f32.mrb[0].mxu0
        %1159 = vmatprep.mubr.bf16.mxu0 0
        %1160 = vmatmul.mubr.bf16.gmra.mrb[0].mxu0 %v939
        %v1161 = vpop.f32.mrb[0].mxu0
        %v1162 = vadd.f32 0.0, %v1161
        %v1163 = vpop.f32.mrb[0].mxu0
        %v1164 = vpop.f32.mrb[0].mxu0
        %v1165 = vadd.f32 0.0, %v1164
        %v1166 = vpop.f32.mrb[0].mxu0
        %1167 = vmatprep.mubr.bf16.mxu0 0
        %1168 = vmatmul.mubr.bf16.gmra.mrb[0].mxu0 %v940
        %v1169 = vpop.f32.mrb[0].mxu0
        %v1170 = vadd.f32 0.0, %v1169
        %v1171 = vpop.f32.mrb[0].mxu0
        %v1172 = vpop.f32.mrb[0].mxu0
        %v1173 = vadd.f32 0.0, %v1172
        %v1174 = vpop.f32.mrb[0].mxu0
        %1175 = vmatprep.mubr.bf16.mxu0 0
        %1176 = vmatmul.mubr.bf16.gmra.mrb[0].mxu0 %v941
        %v1177 = vpop.f32.mrb[0].mxu0
        %v1178 = vadd.f32 0.0, %v1177
        %v1179 = vpop.f32.mrb[0].mxu0
        %v1180 = vpop.f32.mrb[0].mxu0
        %v1181 = vadd.f32 0.0, %v1180
        %v1182 = vpop.f32.mrb[0].mxu0
        %1183 = vdwg.mxu0
        %v1184 = vadd.f32 %v784, %v1122
        %v1185 = vadd.f32 %v788, %v1125
        %v1186 = vadd.f32 %v794, %v1130
        %v1187 = vadd.f32 %v798, %v1133
        %v1188 = vadd.f32 %v804, %v1138
        %v1189 = vadd.f32 %v808, %v1141
        %v1190 = vadd.f32 %v814, %v1146
        %v1191 = vadd.f32 %v818, %v1149
        %v1192 = vadd.f32 %v824, %v1154
        %v1193 = vadd.f32 %v828, %v1157
        %v1194 = vadd.f32 %v834, %v1162
        %v1195 = vadd.f32 %v838, %v1165
        %v1196 = vadd.f32 %v844, %v1170
        %v1197 = vadd.f32 %v848, %v1173
        %v1198 = vadd.f32 %v854, %v1178
        %v1199 = vadd.f32 %v858, %v1181
        %v1200 = vtanh.pop %v1184
        %v1201 = vtanh.pop %v1185
        %v1202 = vtanh.pop %v1186
        %v1203 = vtanh.pop %v1187
        %v1204 = vtanh.pop %v1188
        %v1205 = vtanh.pop %v1189
        %v1206 = vtanh.pop %v1190
        %v1207 = vtanh.pop %v1191
        %v1208 = vtanh.pop %v1192
        %v1209 = vtanh.pop %v1193
        %v1210 = vtanh.pop %v1194
        %v1211 = vtanh.pop %v1195
        %v1212 = vtanh.pop %v1196
        %v1213 = vtanh.pop %v1197
        %v1214 = vtanh.pop %v1198
        %v1215 = vtanh.pop %v1199
        %v1216 = vpack.c.bf16 %v1201, %v1200
        %v1217 = vpack.c.bf16 %v1203, %v1202
        %v1218 = vpack.c.bf16 %v1205, %v1204
        %v1219 = vpack.c.bf16 %v1207, %v1206
        %v1220 = vpack.c.bf16 %v1209, %v1208
        %v1221 = vpack.c.bf16 %v1211, %v1210
        %v1222 = vpack.c.bf16 %v1213, %v1212
        %v1223 = vpack.c.bf16 %v1215, %v1214
        %1224 = vmatprep.subr.bf16.mxu0 0
        %1225 = vmatpush1.bf16.msra.mxu0 %v1216
        %1226 = vmatprep.subr.bf16.mxu0 0
        %1227 = vmatpush1.bf16.msra.mxu0 %v1217
        %1228 = vmatprep.subr.bf16.mxu0 0
        %1229 = vmatpush1.bf16.msra.mxu0 %v1218
        %1230 = vmatprep.subr.bf16.mxu0 0
        %1231 = vmatpush1.bf16.msra.mxu0 %v1219
        %1232 = vmatprep.subr.bf16.mxu0 0
        %1233 = vmatpush1.bf16.msra.mxu0 %v1220
        %1234 = vmatprep.subr.bf16.mxu0 0
        %1235 = vmatpush1.bf16.msra.mxu0 %v1221
        %1236 = vmatprep.subr.bf16.mxu0 0
        %1237 = vmatpush1.bf16.msra.mxu0 %v1222
        %1238 = vmatprep.subr.bf16.mxu0 0
        %1239 = vmatpush1.bf16.msra.mxu0 %v1223
        %1240 = vmatprep.subr.bf16.mxu0 0
        %1241 = vmatpush1.bf16.msra.mxu0 0
        %1242 = vmatprep.subr.bf16.mxu0 0
        %1243 = vmatpush1.bf16.msra.mxu0 0
        %1244 = vmatprep.subr.bf16.mxu0 0
        %1245 = vmatpush1.bf16.msra.mxu0 0
        %1246 = vmatprep.subr.bf16.mxu0 0
        %1247 = vmatpush1.bf16.msra.mxu0 0
        %1248 = vmatprep.subr.bf16.mxu0 0
        %1249 = vmatpush1.bf16.msra.mxu0 0
        %1250 = vmatprep.subr.bf16.mxu0 0
        %1251 = vmatpush1.bf16.msra.mxu0 0
        %1252 = vmatprep.subr.bf16.mxu0 0
        %1253 = vmatpush1.bf16.msra.mxu0 0
        %1254 = vmatprep.subr.bf16.mxu0 0
        %1255 = vmatpush1.bf16.msra.mxu0 0
        %1256 = vmatprep.mubr.bf16.mxu0 0
        %1257 = vmatmul.mubr.bf16.gmra.mrb[0].mxu0 %v934
        %v1258 = vpop.f32.mrb[0].mxu0
        %v1259 = vadd.f32 0.0, %v1258
        %v1260 = vpop.f32.mrb[0].mxu0
        %v1261 = vpop.f32.mrb[0].mxu0
        %v1262 = vadd.f32 0.0, %v1261
        %v1263 = vpop.f32.mrb[0].mxu0
        %1264 = vmatprep.mubr.bf16.mxu0 0
        %1265 = vmatmul.mubr.bf16.gmra.mrb[0].mxu0 %v935
        %v1266 = vpop.f32.mrb[0].mxu0
        %v1267 = vadd.f32 0.0, %v1266
        %v1268 = vpop.f32.mrb[0].mxu0
        %v1269 = vpop.f32.mrb[0].mxu0
        %v1270 = vadd.f32 0.0, %v1269
        %v1271 = vpop.f32.mrb[0].mxu0
        %1272 = vmatprep.mubr.bf16.mxu0 0
        %1273 = vmatmul.mubr.bf16.gmra.mrb[0].mxu0 %v936
        %v1274 = vpop.f32.mrb[0].mxu0
        %v1275 = vadd.f32 0.0, %v1274
        %v1276 = vpop.f32.mrb[0].mxu0
        %v1277 = vpop.f32.mrb[0].mxu0
        %v1278 = vadd.f32 0.0, %v1277
        %v1279 = vpop.f32.mrb[0].mxu0
        %1280 = vmatprep.mubr.bf16.mxu0 0
        %1281 = vmatmul.mubr.bf16.gmra.mrb[0].mxu0 %v937
        %v1282 = vpop.f32.mrb[0].mxu0
        %v1283 = vadd.f32 0.0, %v1282
        %v1284 = vpop.f32.mrb[0].mxu0
        %v1285 = vpop.f32.mrb[0].mxu0
        %v1286 = vadd.f32 0.0, %v1285
        %v1287 = vpop.f32.mrb[0].mxu0
        %1288 = vmatprep.mubr.bf16.mxu0 0
        %1289 = vmatmul.mubr.bf16.gmra.mrb[0].mxu0 %v938
        %v1290 = vpop.f32.mrb[0].mxu0
        %v1291 = vadd.f32 0.0, %v1290
        %v1292 = vpop.f32.mrb[0].mxu0
        %v1293 = vpop.f32.mrb[0].mxu0
        %v1294 = vadd.f32 0.0, %v1293
        %v1295 = vpop.f32.mrb[0].mxu0
        %1296 = vmatprep.mubr.bf16.mxu0 0
        %1297 = vmatmul.mubr.bf16.gmra.mrb[0].mxu0 %v939
        %v1298 = vpop.f32.mrb[0].mxu0
        %v1299 = vadd.f32 0.0, %v1298
        %v1300 = vpop.f32.mrb[0].mxu0
        %v1301 = vpop.f32.mrb[0].mxu0
        %v1302 = vadd.f32 0.0, %v1301
        %v1303 = vpop.f32.mrb[0].mxu0
        %1304 = vmatprep.mubr.bf16.mxu0 0
        %1305 = vmatmul.mubr.bf16.gmra.mrb[0].mxu0 %v940
        %v1306 = vpop.f32.mrb[0].mxu0
        %v1307 = vadd.f32 0.0, %v1306
        %v1308 = vpop.f32.mrb[0].mxu0
        %v1309 = vpop.f32.mrb[0].mxu0
        %v1310 = vadd.f32 0.0, %v1309
        %v1311 = vpop.f32.mrb[0].mxu0
        %1312 = vmatprep.mubr.bf16.mxu0 0
        %1313 = vmatmul.mubr.bf16.gmra.mrb[0].mxu0 %v941
        %v1314 = vpop.f32.mrb[0].mxu0
        %v1315 = vadd.f32 0.0, %v1314
        %v1316 = vpop.f32.mrb[0].mxu0
        %v1317 = vpop.f32.mrb[0].mxu0
        %v1318 = vadd.f32 0.0, %v1317
        %v1319 = vpop.f32.mrb[0].mxu0
        %1320 = vdwg.mxu0
        %v1321 = vadd.f32 %v786, %v1259
        %v1322 = vadd.f32 %v790, %v1262
        %v1323 = vadd.f32 %v796, %v1267
        %v1324 = vadd.f32 %v800, %v1270
        %v1325 = vadd.f32 %v806, %v1275
        %v1326 = vadd.f32 %v810, %v1278
        %v1327 = vadd.f32 %v816, %v1283
        %v1328 = vadd.f32 %v820, %v1286
        %v1329 = vadd.f32 %v826, %v1291
        %v1330 = vadd.f32 %v830, %v1294
        %v1331 = vadd.f32 %v836, %v1299
        %v1332 = vadd.f32 %v840, %v1302
        %v1333 = vadd.f32 %v846, %v1307
        %v1334 = vadd.f32 %v850, %v1310
        %v1335 = vadd.f32 %v856, %v1315
        %v1336 = vadd.f32 %v860, %v1318
        %v1337 = vtanh.pop %v1321
        %v1338 = vtanh.pop %v1322
        %v1339 = vtanh.pop %v1323
        %v1340 = vtanh.pop %v1324
        %v1341 = vtanh.pop %v1325
        %v1342 = vtanh.pop %v1326
        %v1343 = vtanh.pop %v1327
        %v1344 = vtanh.pop %v1328
        %v1345 = vtanh.pop %v1329
        %v1346 = vtanh.pop %v1330
        %v1347 = vtanh.pop %v1331
        %v1348 = vtanh.pop %v1332
        %v1349 = vtanh.pop %v1333
        %v1350 = vtanh.pop %v1334
        %v1351 = vtanh.pop %v1335
        %v1352 = vtanh.pop %v1336
        %s1353 = sld [smem:[#allocation6]]
        %v1354 = vstv %s1353
        %v1355 = vmul.f32 %v1354, %v1337
        %v1356 = vmul.f32 %v1354, %v1338
        %v1357 = vmul.f32 %v1354, %v1339
        %v1358 = vmul.f32 %v1354, %v1340
        %s1359 = sld [smem:[#allocation6 + $0x1]]
        %v1360 = vstv %s1359
        %v1361 = vmul.f32 %v1360, %v1341
        %v1362 = vmul.f32 %v1360, %v1342
        %v1363 = vmul.f32 %v1360, %v1343
        %v1364 = vmul.f32 %v1360, %v1344
        %v1365 = vadd.f32 %v1355, %v1361
        %v1366 = vadd.f32 %v1356, %v1362
        %v1367 = vadd.f32 %v1357, %v1363
        %v1368 = vadd.f32 %v1358, %v1364
        %s1369 = sld [smem:[#allocation6 + $0x2]]
        %v1370 = vstv %s1369
        %v1371 = vmul.f32 %v1370, %v1345
        %v1372 = vmul.f32 %v1370, %v1346
        %v1373 = vmul.f32 %v1370, %v1347
        %v1374 = vmul.f32 %v1370, %v1348
        %v1375 = vadd.f32 %v1365, %v1371
        %v1376 = vadd.f32 %v1366, %v1372
        %v1377 = vadd.f32 %v1367, %v1373
        %v1378 = vadd.f32 %v1368, %v1374
        %s1379 = sld [smem:[#allocation6 + $0x3]]
        %v1380 = vstv %s1379
        %v1381 = vmul.f32 %v1380, %v1349
        %v1382 = vmul.f32 %v1380, %v1350
        %v1383 = vmul.f32 %v1380, %v1351
        %v1384 = vmul.f32 %v1380, %v1352
        %v1385 = vadd.f32 %v1375, %v1381
        %v1386 = vadd.f32 %v1376, %v1382
        %v1387 = vadd.f32 %v1377, %v1383
        %v1388 = vadd.f32 %v1378, %v1384
        %v1389 = vxor.u32 %v1385, 2147483648
        %v1390 = vxor.u32 %v1386, 2147483648
        %v1391 = vxor.u32 %v1387, 2147483648
        %v1392 = vxor.u32 %v1388, 2147483648
        %v1393 = vmul.f32 %v1389, 1.442695
        %v1394 = vpow.pop %v1393
        %v1395 = vmul.f32 %v1390, 1.442695
        %v1396 = vpow.pop %v1395
        %v1397 = vmul.f32 %v1391, 1.442695
        %v1398 = vpow.pop %v1397
        %v1399 = vmul.f32 %v1392, 1.442695
        %v1400 = vpow.pop %v1399
        %v1401 = vadd.f32 %v1394, 1.0
        %v1402 = vadd.f32 %v1396, 1.0
        %v1403 = vadd.f32 %v1398, 1.0
        %v1404 = vadd.f32 %v1400, 1.0
        %v1405 = vrcp.pop %v1401
        %v1406 = vmul.f32 1.0, %v1405
        %v1407 = vrcp.pop %v1402
        %v1408 = vmul.f32 1.0, %v1407
        %v1409 = vrcp.pop %v1403
        %v1410 = vmul.f32 1.0, %v1409
        %v1411 = vrcp.pop %v1404
        %v1412 = vmul.f32 1.0, %v1411
        %s1413 = sld [smem:[#allocation6 + $0x4]]
        %v1414 = vstv %s1413
        %v1415 = vmul.f32 %v1414, %v1337
        %v1416 = vmul.f32 %v1414, %v1338
        %v1417 = vmul.f32 %v1414, %v1339
        %v1418 = vmul.f32 %v1414, %v1340
        %s1419 = sld [smem:[#allocation6 + $0x5]]
        %v1420 = vstv %s1419
        %v1421 = vmul.f32 %v1420, %v1341
        %v1422 = vmul.f32 %v1420, %v1342
        %v1423 = vmul.f32 %v1420, %v1343
        %v1424 = vmul.f32 %v1420, %v1344
        %v1425 = vadd.f32 %v1415, %v1421
        %v1426 = vadd.f32 %v1416, %v1422
        %v1427 = vadd.f32 %v1417, %v1423
        %v1428 = vadd.f32 %v1418, %v1424
        %s1429 = sld [smem:[#allocation6 + $0x6]]
        %v1430 = vstv %s1429
        %v1431 = vmul.f32 %v1430, %v1345
        %v1432 = vmul.f32 %v1430, %v1346
        %v1433 = vmul.f32 %v1430, %v1347
        %v1434 = vmul.f32 %v1430, %v1348
        %v1435 = vadd.f32 %v1425, %v1431
        %v1436 = vadd.f32 %v1426, %v1432
        %v1437 = vadd.f32 %v1427, %v1433
        %v1438 = vadd.f32 %v1428, %v1434
        %s1439 = sld [smem:[#allocation6 + $0x7]]
        %v1440 = vstv %s1439
        %v1441 = vmul.f32 %v1440, %v1349
        %v1442 = vmul.f32 %v1440, %v1350
        %v1443 = vmul.f32 %v1440, %v1351
        %v1444 = vmul.f32 %v1440, %v1352
        %v1445 = vadd.f32 %v1435, %v1441
        %v1446 = vadd.f32 %v1436, %v1442
        %v1447 = vadd.f32 %v1437, %v1443
        %v1448 = vadd.f32 %v1438, %v1444
        %v1449 = vxor.u32 %v1445, 2147483648
        %v1450 = vxor.u32 %v1446, 2147483648
        %v1451 = vxor.u32 %v1447, 2147483648
        %v1452 = vxor.u32 %v1448, 2147483648
        %v1453 = vmul.f32 %v1449, 1.442695
        %v1454 = vpow.pop %v1453
        %v1455 = vmul.f32 %v1450, 1.442695
        %v1456 = vpow.pop %v1455
        %v1457 = vmul.f32 %v1451, 1.442695
        %v1458 = vpow.pop %v1457
        %v1459 = vmul.f32 %v1452, 1.442695
        %v1460 = vpow.pop %v1459
        %v1461 = vadd.f32 %v1454, 1.0
        %v1462 = vadd.f32 %v1456, 1.0
        %v1463 = vadd.f32 %v1458, 1.0
        %v1464 = vadd.f32 %v1460, 1.0
        %v1465 = vrcp.pop %v1461
        %v1466 = vmul.f32 1.0, %v1465
        %v1467 = vrcp.pop %v1462
        %v1468 = vmul.f32 1.0, %v1467
        %v1469 = vrcp.pop %v1463
        %v1470 = vmul.f32 1.0, %v1469
        %v1471 = vrcp.pop %v1464
        %v1472 = vmul.f32 1.0, %v1471
        %s1473 = sld [smem:[#allocation6 + $0x8]]
        %v1474 = vstv %s1473
        %v1475 = vmul.f32 %v1474, %v1337
        %v1476 = vmul.f32 %v1474, %v1338
        %v1477 = vmul.f32 %v1474, %v1339
        %v1478 = vmul.f32 %v1474, %v1340
        %s1479 = sld [smem:[#allocation6 + $0x9]]
        %v1480 = vstv %s1479
        %v1481 = vmul.f32 %v1480, %v1341
        %v1482 = vmul.f32 %v1480, %v1342
        %v1483 = vmul.f32 %v1480, %v1343
        %v1484 = vmul.f32 %v1480, %v1344
        %v1485 = vadd.f32 %v1475, %v1481
        %v1486 = vadd.f32 %v1476, %v1482
        %v1487 = vadd.f32 %v1477, %v1483
        %v1488 = vadd.f32 %v1478, %v1484
        %s1489 = sld [smem:[#allocation6 + $0xa]]
        %v1490 = vstv %s1489
        %v1491 = vmul.f32 %v1490, %v1345
        %v1492 = vmul.f32 %v1490, %v1346
        %v1493 = vmul.f32 %v1490, %v1347
        %v1494 = vmul.f32 %v1490, %v1348
        %v1495 = vadd.f32 %v1485, %v1491
        %v1496 = vadd.f32 %v1486, %v1492
        %v1497 = vadd.f32 %v1487, %v1493
        %v1498 = vadd.f32 %v1488, %v1494
        %s1499 = sld [smem:[#allocation6 + $0xb]]
        %v1500 = vstv %s1499
        %v1501 = vmul.f32 %v1500, %v1349
        %v1502 = vmul.f32 %v1500, %v1350
        %v1503 = vmul.f32 %v1500, %v1351
        %v1504 = vmul.f32 %v1500, %v1352
        %v1505 = vadd.f32 %v1495, %v1501
        %v1506 = vadd.f32 %v1496, %v1502
        %v1507 = vadd.f32 %v1497, %v1503
        %v1508 = vadd.f32 %v1498, %v1504
        %v1509 = vxor.u32 %v1505, 2147483648
        %v1510 = vxor.u32 %v1506, 2147483648
        %v1511 = vxor.u32 %v1507, 2147483648
        %v1512 = vxor.u32 %v1508, 2147483648
        %v1513 = vmul.f32 %v1509, 1.442695
        %v1514 = vpow.pop %v1513
        %v1515 = vmul.f32 %v1510, 1.442695
        %v1516 = vpow.pop %v1515
        %v1517 = vmul.f32 %v1511, 1.442695
        %v1518 = vpow.pop %v1517
        %v1519 = vmul.f32 %v1512, 1.442695
        %v1520 = vpow.pop %v1519
        %v1521 = vadd.f32 %v1514, 1.0
        %v1522 = vadd.f32 %v1516, 1.0
        %v1523 = vadd.f32 %v1518, 1.0
        %v1524 = vadd.f32 %v1520, 1.0
        %v1525 = vrcp.pop %v1521
        %v1526 = vmul.f32 1.0, %v1525
        %v1527 = vrcp.pop %v1522
        %v1528 = vmul.f32 1.0, %v1527
        %v1529 = vrcp.pop %v1523
        %v1530 = vmul.f32 1.0, %v1529
        %v1531 = vrcp.pop %v1524
        %v1532 = vmul.f32 1.0, %v1531
        %s1533 = sld [smem:[#allocation6 + $0xc]]
        %v1534 = vstv %s1533
        %v1535 = vmul.f32 %v1534, %v1337
        %v1536 = vmul.f32 %v1534, %v1338
        %v1537 = vmul.f32 %v1534, %v1339
        %v1538 = vmul.f32 %v1534, %v1340
        %s1539 = sld [smem:[#allocation6 + $0xd]]
        %v1540 = vstv %s1539
        %v1541 = vmul.f32 %v1540, %v1341
        %v1542 = vmul.f32 %v1540, %v1342
        %v1543 = vmul.f32 %v1540, %v1343
        %v1544 = vmul.f32 %v1540, %v1344
        %v1545 = vadd.f32 %v1535, %v1541
        %v1546 = vadd.f32 %v1536, %v1542
        %v1547 = vadd.f32 %v1537, %v1543
        %v1548 = vadd.f32 %v1538, %v1544
        %s1549 = sld [smem:[#allocation6 + $0xe]]
        %v1550 = vstv %s1549
        %v1551 = vmul.f32 %v1550, %v1345
        %v1552 = vmul.f32 %v1550, %v1346
        %v1553 = vmul.f32 %v1550, %v1347
        %v1554 = vmul.f32 %v1550, %v1348
        %v1555 = vadd.f32 %v1545, %v1551
        %v1556 = vadd.f32 %v1546, %v1552
        %v1557 = vadd.f32 %v1547, %v1553
        %v1558 = vadd.f32 %v1548, %v1554
        %s1559 = sld [smem:[#allocation6 + $0xf]]
        %v1560 = vstv %s1559
        %v1561 = vmul.f32 %v1560, %v1349
        %v1562 = vmul.f32 %v1560, %v1350
        %v1563 = vmul.f32 %v1560, %v1351
        %v1564 = vmul.f32 %v1560, %v1352
        %v1565 = vadd.f32 %v1555, %v1561
        %v1566 = vadd.f32 %v1556, %v1562
        %v1567 = vadd.f32 %v1557, %v1563
        %v1568 = vadd.f32 %v1558, %v1564
        %v1569 = vxor.u32 %v1565, 2147483648
        %v1570 = vxor.u32 %v1566, 2147483648
        %v1571 = vxor.u32 %v1567, 2147483648
        %v1572 = vxor.u32 %v1568, 2147483648
        %v1573 = vmul.f32 %v1569, 1.442695
        %v1574 = vpow.pop %v1573
        %v1575 = vmul.f32 %v1570, 1.442695
        %v1576 = vpow.pop %v1575
        %v1577 = vmul.f32 %v1571, 1.442695
        %v1578 = vpow.pop %v1577
        %v1579 = vmul.f32 %v1572, 1.442695
        %v1580 = vpow.pop %v1579
        %v1581 = vadd.f32 %v1574, 1.0
        %v1582 = vadd.f32 %v1576, 1.0
        %v1583 = vadd.f32 %v1578, 1.0
        %v1584 = vadd.f32 %v1580, 1.0
        %v1585 = vrcp.pop %v1581
        %v1586 = vmul.f32 1.0, %v1585
        %v1587 = vrcp.pop %v1582
        %v1588 = vmul.f32 1.0, %v1587
        %v1589 = vrcp.pop %v1583
        %v1590 = vmul.f32 1.0, %v1589
        %v1591 = vrcp.pop %v1584
        %v1592 = vmul.f32 1.0, %v1591
        %v1593 = vld [vmem:[%s3] sm:$0xf]
        %v1594 = vpack.c.bf16 %v1408, %v1406
        %v1595 = vpack.c.bf16 %v1412, %v1410
        %v1596 = vpack.c.bf16 %v1468, %v1466
        %v1597 = vpack.c.bf16 %v1472, %v1470
        %v1598 = vpack.c.bf16 %v1528, %v1526
        %v1599 = vpack.c.bf16 %v1532, %v1530
        %v1600 = vpack.c.bf16 %v1588, %v1586
        %v1601 = vpack.c.bf16 %v1592, %v1590
        %1602 = vmatprep.subr.bf16.mxu0 0
        %1603 = vmatpush1.bf16.msra.mxu0 %v1594
        %1604 = vmatprep.subr.bf16.mxu0 0
        %1605 = vmatpush1.bf16.msra.mxu0 %v1595
        %1606 = vmatprep.subr.bf16.mxu0 0
        %1607 = vmatpush1.bf16.msra.mxu0 %v1596
        %1608 = vmatprep.subr.bf16.mxu0 0
        %1609 = vmatpush1.bf16.msra.mxu0 %v1597
        %1610 = vmatprep.subr.bf16.mxu0 0
        %1611 = vmatpush1.bf16.msra.mxu0 %v1598
        %1612 = vmatprep.subr.bf16.mxu0 0
        %1613 = vmatpush1.bf16.msra.mxu0 %v1599
        %1614 = vmatprep.subr.bf16.mxu0 0
        %1615 = vmatpush1.bf16.msra.mxu0 %v1600
        %1616 = vmatprep.subr.bf16.mxu0 0
        %1617 = vmatpush1.bf16.msra.mxu0 %v1601
        %1618 = vmatprep.subr.bf16.mxu0 0
        %1619 = vmatpush1.bf16.msra.mxu0 0
        %1620 = vmatprep.subr.bf16.mxu0 0
        %1621 = vmatpush1.bf16.msra.mxu0 0
        %1622 = vmatprep.subr.bf16.mxu0 0
        %1623 = vmatpush1.bf16.msra.mxu0 0
        %1624 = vmatprep.subr.bf16.mxu0 0
        %1625 = vmatpush1.bf16.msra.mxu0 0
        %1626 = vmatprep.subr.bf16.mxu0 0
        %1627 = vmatpush1.bf16.msra.mxu0 0
        %1628 = vmatprep.subr.bf16.mxu0 0
        %1629 = vmatpush1.bf16.msra.mxu0 0
        %1630 = vmatprep.subr.bf16.mxu0 0
        %1631 = vmatpush1.bf16.msra.mxu0 0
        %1632 = vmatprep.subr.bf16.mxu0 0
        %1633 = vmatpush1.bf16.msra.mxu0 0
        %1634 = vmatprep.mubr.bf16.mxu0 0
        %1635 = vmatmul.mubr.bf16.gmra.mrb[0].mxu0 %v1593
        %v1636 = vpop.f32.mrb[0].mxu0
        %v1637 = vadd.f32 0.0, %v1636
        %v1638 = vpop.f32.mrb[0].mxu0
        %v1639 = vpop.f32.mrb[0].mxu0
        %v1640 = vpop.f32.mrb[0].mxu0
        %1641 = vdwg.mxu0
        %s1642 = sld [smem:[#allocation6 + $0x10]]
        %v1643 = vstv %s1642
        %v1644 = vadd.f32 %v1637, %v1643
        %v1645 = vxor.u32 %v1644, 2147483648
        %v1646 = vmul.f32 %v1645, 1.442695
        %v1647 = vpow.pop %v1646
        %v1648 = vadd.f32 %v1647, 1.0
        %v1649 = vrcp.pop %v1648
        %v1650 = vmul.f32 1.0, %v1649
        %vm1651 = vcmask 1043456
        %v1652 = vsel %vm1651, %v1650, -inf
        %v1653 = vrot.slane %v1652, 4
        %v1654 = vmax.f32 %v1652, %v1653
        %v1655 = vrot.slane %v1654, 2
        %v1656 = vmax.f32 %v1654, %v1655
        %v1657 = vrot.slane %v1656, 1
        %v1658 = vmax.f32 %v1656, %v1657
        %v1659 = vsub.f32 %v1650, %v1658
        %v1660 = vmul.f32 %v1659, 1.442695
        %v1661 = vpow.pop %v1660
        %v1662 = vsel %vm1651, %v1661, 0.0
        %v1663 = vrot.slane %v1662, 4
        %v1664 = vadd.f32 %v1662, %v1663
        %v1665 = vrot.slane %v1664, 2
        %v1666 = vadd.f32 %v1664, %v1665
        %v1667 = vrot.slane %v1666, 1
        %v1668 = vadd.f32 %v1666, %v1667
        %v1669 = vrcp.pop %v1668
        %v1670 = vmul.f32 %v1661, %v1669
        %v1672 = vrot.slane %v1637, 4
        %v1674 = vmul.f32 %v1670, %v1672
        %v1675 = vsel %vm1651, %v1674, 0.0
        %v1676 = vrot.slane %v1675, 4
        %v1677 = vadd.f32 %v1675, %v1676
        %v1678 = vrot.slane %v1677, 2
        %v1679 = vadd.f32 %v1677, %v1678
        %v1680 = vrot.slane %v1679, 1
        %v1681 = vadd.f32 %v1679, %v1680
        %s1682 = sld [smem:[#allocation6 + $0x11]]
        %v1683 = vstv %s1682
        %v1684 = vadd.f32 %v1681, %v1683
        %v1685 = vxor.u32 %v1684, 2147483648
        %v1686 = vmul.f32 %v1685, 1.442695
        %v1687 = vpow.pop %v1686
        %v1688 = vadd.f32 %v1687, 1.0
        %v1689 = vrcp.pop %v1688
        %v1690 = vmul.f32 1.0, %v1689
        %1691 = vst [vmem:[%s282] sm:$0x1] %v1690
        %s1692 = sand.u32 %s163, 1
        %s1693 = scalar_lea.sflag [#allocation4], %s1692
        %s1694 = sand.u32 %s163, 1
        %s1695 = scalar_lea.vmem [#allocation7], %s1694
        // Predicated region
        $region53: #{tpu_custom_call.1} parent=43 // pred_check
          %p1696 = pneg %p173
        $region54: #{tpu_custom_call.1} parent=43 // pred_check_branch
          %1698 = sbr.rel (%p1696) target = $region56
        $region55: #{tpu_custom_call.1} parent=43 // pred_region
          %s1700 = ssub.s32 16, 16
          %1701 = vsyncadd %s1693, %s1700
          %s1702 = smul.addr %s24, 16
          %s1703 = scalar_lea.hbm %s6, %s1702
          %s1705 = sshll.u32 %s1695, 4
          %s1706 = int_to_ptr.vmem [resolvable:$true] %s1705
          %1708 = dma.vmem_to_hbm [thread:$0]  %s1706, 16, %s1703, %s1693
        $region56: #{tpu_custom_call.1} parent=43 // pred_fallthru
          _
      $region44: #{tpu_custom_call.1} parent=5 // pred_fallthru
        _
      %p1709 = scmp.le.s32.totalorder 2, %s19
      // Predicated region
      $region57: #{tpu_custom_call.1} parent=5 // pred_check
        %p1710 = pneg %p1709
      $region58: #{tpu_custom_call.1} parent=5 // pred_check_branch
        %1712 = sbr.rel (%p1710) target = $region60
      $region59: #{tpu_custom_call.1} parent=5 // pred_region
        %s1713 = ssub.s32 %s19, 2
        // Predicated region
        $region61: #{tpu_custom_call.1} parent=59 // pred_check
          %p1714 = pneg %p179
        $region62: #{tpu_custom_call.1} parent=59 // pred_check_branch
          %1716 = sbr.rel (%p1714) target = $region64
        $region63: #{tpu_custom_call.1} parent=59 // pred_region
          %s1717 = sand.u32 %s164, 1
          %s1718 = scalar_lea.sflag [#allocation4], %s1717
          %s1719 = sand.u32 %s164, 1
          %s1720 = scalar_lea.vmem [#allocation7], %s1719
          %1721 = dma.done %s1718, 16
        $region64: #{tpu_custom_call.1} parent=59 // pred_fallthru
          _
      $region60: #{tpu_custom_call.1} parent=5 // pred_fallthru
        _
    $region6: #{tpu_custom_call.1} parent=1 // loop_footer
      %s23 = sadd.s32 1, %s19
    $region7: #{tpu_custom_call.1} parent=1 // loop_footer_branch
      %18 = sbr.rel target = $region3
    $region8: #{tpu_custom_call.1} parent=1 // loop_exit
      _
    %1722 = vsyncpa [#allocation3], 1
    %s1723 = scalar_lea.sflag [#allocation3], 1
    %1724 = vsyncpa %s1723, 1
    %1725 = vsyncpa [#allocation4], 1
    %s1726 = scalar_lea.sflag [#allocation4], 1
    %1727 = vsyncpa %s1726, 1
    %1728 = vsyncpa [#allocation5], 1
    %s1729 = scalar_lea.sflag [#allocation5], 1
    %1730 = vsyncpa %s1729, 1

</llo_original>
